<compile_context>
chip_gen: v7x
topology: tpu7x:2x2x1
jax: 0.10.0
libtpu: 0.0.40
codegen_flags: <defaults>
</compile_context>

<pallas_src>
import functools

import jax
import jax.numpy as jnp
from jax.experimental import pallas as pl
from jax.experimental.pallas import tpu as pltpu


REID_DIM = 256   # hard-coded in SIPN.__init__ (reid_feat_dim)
NUM_CLS = 2
NUM_BBOX = 8


def _sipn_head_kernel(feat_ref, w_ref, b_ref, out_ref, *, cls_off):
    # feat: (TILE_N, C, H*W) f32, straight from the NCHW layout (no transpose).
    # fc7 = tail(pooled_feat).mean(3).mean(2)  -> mean over the spatial axis.
    fc7 = jnp.mean(feat_ref[...], axis=-1)                         # (TILE_N, C)

    # One fused MXU matmul covering cls_score_net + bbox_pred_net + reid_feat_net.
    # bf16 operands, f32 accumulation; biases and bbox stds/means already folded.
    fused = jnp.dot(fc7.astype(w_ref.dtype), w_ref[...],
                    preferred_element_type=jnp.float32) + b_ref[...]

    # 2-class softmax on the cls columns (F.softmax(cls_score)).
    cls = fused[:, cls_off:cls_off + NUM_CLS]
    m = jnp.max(cls, axis=-1, keepdims=True)
    e = jnp.exp(cls - m)
    prob = e * pl.reciprocal(jnp.sum(e, axis=-1, keepdims=True), approx=True)

    # Single lane-dense store, then overwrite the 2 cls lanes with probabilities.
    out_ref[...] = fused
    out_ref[:, cls_off:cls_off + NUM_CLS] = prob


def pack_sipn_head_params(wc, bc, wb, bb, wr, br, means, stds,
                          weight_dtype=jnp.bfloat16):
    """One-time (model-load) packing of the three Linear heads.

    PyTorch-layout weights (out_features, in_features) are transposed once,
    the bbox de-normalization (mul stds / add means) is folded into the bbox
    weights/bias, and everything is concatenated into one lane-dense (C, 384)
    matrix: [reid 0:256 | cls 256:258 | bbox 258:266 | zero pad 266:384].
    """
    C = wr.shape[1]
    wb_folded = wb * stds[:, None]                 # (8, C)
    bb_folded = bb * stds + means                  # (8,)

    out_dim = REID_DIM + NUM_CLS + NUM_BBOX        # 266
    padded = int(pl.cdiv(out_dim, 128) * 128)      # 384 -> lane-dense output

    w = jnp.zeros((C, padded), jnp.float32)
    w = w.at[:, :REID_DIM].set(wr.T)
    w = w.at[:, REID_DIM:REID_DIM + NUM_CLS].set(wc.T)
    w = w.at[:, REID_DIM + NUM_CLS:out_dim].set(wb_folded.T)

    b = jnp.zeros((1, padded), jnp.float32)
    b = b.at[0, :REID_DIM].set(br)
    b = b.at[0, REID_DIM:REID_DIM + NUM_CLS].set(bc)
    b = b.at[0, REID_DIM + NUM_CLS:out_dim].set(bb_folded)

    return w.astype(weight_dtype), b               # bias stays f32


def sipn_head(pooled_tail_nchw, w_packed, b_packed, *, tile_n=256):
    """pooled_tail_nchw: (N, C, H, W) f32 output of self.tail for N ROIs.
    w_packed/b_packed: output of pack_sipn_head_params (done once at load)."""
    N, C, H, W = pooled_tail_nchw.shape
    fused_dim = w_packed.shape[1]
    hw = H * W
    feat = pooled_tail_nchw.reshape(N, C, hw)      # free reshape, no HBM transpose

    # Full-N block if it fits, else a multiple-of-8 tile over N.
    tile_n = N if N <= tile_n else tile_n
    grid = (pl.cdiv(N, tile_n),)

    fused = pl.pallas_call(
        functools.partial(_sipn_head_kernel, cls_off=REID_DIM),
        out_shape=jax.ShapeDtypeStruct((N, fused_dim), jnp.float32),
        grid=grid,
        in_specs=[
            pl.BlockSpec((tile_n, C, hw), lambda i: (i, 0, 0)),   # ROI features
            pl.BlockSpec((C, fused_dim), lambda i: (0, 0)),       # resident weights
            pl.BlockSpec((1, fused_dim), lambda i: (0, 0)),       # resident bias
        ],
        out_specs=pl.BlockSpec((tile_n, fused_dim), lambda i: (i, 0)),
        compiler_params=pltpu.CompilerParams(
            dimension_semantics=("parallel",)),                   # 2 TCs on v7x
    )(feat, w_packed, b_packed)

    # Split the fused lane-dense output on the host (free slices).
    reid_feat = fused[:, :REID_DIM]
    cls_prob = fused[:, REID_DIM:REID_DIM + NUM_CLS]
    bbox_pred = fused[:, REID_DIM + NUM_CLS:REID_DIM + NUM_CLS + NUM_BBOX]
    return cls_prob, bbox_pred, reid_feat


if __name__ == "__main__":
    # Small synthetic shapes: 24 ROIs, fc7_channels=128, 4x4 pooled tail output.
    # tile_n=8 so the grid (3 blocks) and the resident-weight path are exercised.
    N, C, H, W = 24, 128, 4, 4

    key = jax.random.PRNGKey(0)
    k_feat, k_cls, k_bbox, k_reid = jax.random.split(key, 4)

    pooled_tail = jax.random.normal(k_feat, (N, C, H, W), dtype=jnp.float32)

    # init_linear_weight(False): normal(0, std), bias zero.
    wc = 0.01 * jax.random.normal(k_cls, (NUM_CLS, C), dtype=jnp.float32)     # cls_score_net
    bc = jnp.zeros((NUM_CLS,), dtype=jnp.float32)
    wb = 0.001 * jax.random.normal(k_bbox, (NUM_BBOX, C), dtype=jnp.float32)  # bbox_pred_net
    bb = jnp.zeros((NUM_BBOX,), dtype=jnp.float32)
    wr = 0.01 * jax.random.normal(k_reid, (REID_DIM, C), dtype=jnp.float32)   # reid_feat_net
    br = jnp.zeros((REID_DIM,), dtype=jnp.float32)

    # TODO(synk): values normally read from config.yml
    # ('train_bbox_normalize_means'/'stds'); fixed deterministic constants here,
    # .repeat(2) as in the module.
    means = jnp.tile(jnp.array([0.0, 0.0, 0.0, 0.0], dtype=jnp.float32), 2)   # (8,)
    stds = jnp.tile(jnp.array([0.1, 0.1, 0.2, 0.2], dtype=jnp.float32), 2)    # (8,)

    # One-time packing (model load), outside the per-call hot path.
    w_packed, b_packed = pack_sipn_head_params(wc, bc, wb, bb, wr, br, means, stds)

    cls_prob, bbox_pred, reid_feat = jax.block_until_ready(
        sipn_head(pooled_tail, w_packed, b_packed, tile_n=8))

    # Pure-JAX (f32) reference check.
    fc7_ref = pooled_tail.mean(axis=3).mean(axis=2)                   # (N, C)
    cls_score_ref = fc7_ref @ wc.T + bc
    cls_prob_ref = jax.nn.softmax(cls_score_ref, axis=1)
    bbox_ref = (fc7_ref @ wb.T + bb) * stds[None, :] + means[None, :]
    reid_ref = fc7_ref @ wr.T + br

    # bf16 matmul operands + approx reciprocal -> ~1e-3-level accuracy.
    assert jnp.allclose(cls_prob, cls_prob_ref, atol=5e-3)
    assert jnp.allclose(bbox_pred, bbox_ref, atol=5e-3)
    assert jnp.allclose(reid_feat, reid_ref, atol=5e-3)
    assert cls_prob.shape == (N, NUM_CLS) and bbox_pred.shape == (N, NUM_BBOX)
    assert reid_feat.shape == (N, REID_DIM)

    print("KERNEL_OK")
</pallas_src>

<mosaic_0001>
module attributes {stable_mosaic.version = 11 : i64} {
  func.func @_sipn_head_kernel(%arg0: i32, %arg1: memref<8x128x16xf32, #tpu.memory_space<vmem>>, %arg2: memref<128x384xbf16, #tpu.memory_space<vmem>>, %arg3: memref<1x384xf32, #tpu.memory_space<vmem>>, %arg4: memref<8x384xf32, #tpu.memory_space<vmem>>) attributes {dimension_semantics = [#tpu.dimension_semantics<parallel>], iteration_bounds = array<i64: 3>, scalar_prefetch = 0 : i64, scratch_operands = 0 : i64, tpu.core_type = #tpu.core_type<tc>, window_params = [{transform_indices = @transform_0, window_bounds = array<i64: 8, 128, 16>}, {pipeline_mode = #tpu.pipeline_mode<synchronous>, transform_indices = @transform_1, window_bounds = array<i64: 128, 384>}, {pipeline_mode = #tpu.pipeline_mode<synchronous>, transform_indices = @transform_2, window_bounds = array<i64: 1, 384>}, {transform_indices = @transform_3, window_bounds = array<i64: 8, 384>}]} {
    %c0 = arith.constant 0 : index
    %c0_0 = arith.constant 0 : index
    %c0_1 = arith.constant 0 : index
    %0 = vector.load %arg1[%c0, %c0_0, %c0_1] : memref<8x128x16xf32, #tpu.memory_space<vmem>>, vector<8x128x16xf32>
    %cst = arith.constant dense<0.000000e+00> : vector<8x128xf32>
    %1 = vector.multi_reduction <add>, %0, %cst [2] : vector<8x128x16xf32> to vector<8x128xf32>
    %cst_2 = arith.constant 1.600000e+01 : f32
    %2 = vector.broadcast %cst_2 : f32 to vector<8x128xf32>
    %3 = arith.divf %1, %2 : vector<8x128xf32>
    %4 = arith.truncf %3 : vector<8x128xf32> to vector<8x128xbf16>
    %c0_3 = arith.constant 0 : index
    %c0_4 = arith.constant 0 : index
    %5 = vector.load %arg2[%c0_3, %c0_4] : memref<128x384xbf16, #tpu.memory_space<vmem>>, vector<128x384xbf16>
    %cst_5 = arith.constant dense<0.000000e+00> : vector<8x384xf32>
    %6 = tpu.matmul %4, %5, %cst_5 {dimension_numbers = #tpu.dot_dimension_numbers<[1], [0], [0], [1], [0, 0, 1, 1], [], []>} : vector<8x128xbf16>, vector<128x384xbf16>, vector<8x384xf32> -> vector<8x384xf32>
    %c0_6 = arith.constant 0 : index
    %c0_7 = arith.constant 0 : index
    %7 = vector.load %arg3[%c0_6, %c0_7] : memref<1x384xf32, #tpu.memory_space<vmem>>, vector<1x384xf32>
    %8 = vector.broadcast %7 : vector<1x384xf32> to vector<8x384xf32>
    %9 = arith.addf %6, %8 : vector<8x384xf32>
    %10 = vector.extract_strided_slice %9 {offsets = [0, 256], sizes = [8, 2], strides = [1, 1]} : vector<8x384xf32> to vector<8x2xf32>
    %cst_8 = arith.constant dense<0xFF800000> : vector<8xf32>
    %11 = vector.multi_reduction <maximumf>, %10, %cst_8 [1] : vector<8x2xf32> to vector<8xf32>
    %12 = vector.shape_cast %11 : vector<8xf32> to vector<8x1xf32>
    %13 = vector.broadcast %12 : vector<8x1xf32> to vector<8x2xf32>
    %14 = arith.subf %10, %13 : vector<8x2xf32>
    %15 = math.exp %14 : vector<8x2xf32>
    %cst_9 = arith.constant dense<0.000000e+00> : vector<8xf32>
    %16 = vector.multi_reduction <add>, %15, %cst_9 [1] : vector<8x2xf32> to vector<8xf32>
    %17 = vector.shape_cast %16 : vector<8xf32> to vector<8x1xf32>
    %18 = tpu.reciprocal %17 {approx = true} : vector<8x1xf32> -> vector<8x1xf32>
    %19 = vector.broadcast %18 : vector<8x1xf32> to vector<8x2xf32>
    %20 = arith.mulf %15, %19 : vector<8x2xf32>
    %c0_10 = arith.constant 0 : index
    %c0_11 = arith.constant 0 : index
    %21 = vector.load %arg4[%c0_10, %c0_11] : memref<8x384xf32, #tpu.memory_space<vmem>>, vector<8x384xf32>
    tpu.vector_store %arg4[%c0_10, %c0_11], %9 {strides = array<i32>} : memref<8x384xf32, #tpu.memory_space<vmem>>, vector<8x384xf32>,
    %c0_12 = arith.constant 0 : index
    %c256 = arith.constant 256 : index
    %22 = vector.load %arg4[%c0_12, %c256] : memref<8x384xf32, #tpu.memory_space<vmem>>, vector<8x2xf32>
    tpu.vector_store %arg4[%c0_12, %c256], %20 {strides = array<i32>} : memref<8x384xf32, #tpu.memory_space<vmem>>, vector<8x2xf32>,
    return
  }
  func.func @transform_0(%arg0: i32) -> (i32, i32, i32) {
    %c0_i32 = arith.constant 0 : i32
    %c0_i32_0 = arith.constant 0 : i32
    %c0_i32_1 = arith.constant 0 : i32
    return %arg0, %c0_i32, %c0_i32_0 : i32, i32, i32
  }
  func.func @transform_1(%arg0: i32) -> (i32, i32) {
    %c0_i32 = arith.constant 0 : i32
    %c0_i32_0 = arith.constant 0 : i32
    %c0_i32_1 = arith.constant 0 : i32
    return %c0_i32, %c0_i32_0 : i32, i32
  }
  func.func @transform_2(%arg0: i32) -> (i32, i32) {
    %c0_i32 = arith.constant 0 : i32
    %c0_i32_0 = arith.constant 0 : i32
    %c0_i32_1 = arith.constant 0 : i32
    return %c0_i32, %c0_i32_0 : i32, i32
  }
  func.func @transform_3(%arg0: i32) -> (i32, i32) {
    %c0_i32 = arith.constant 0 : i32
    %c0_i32_0 = arith.constant 0 : i32
    return %arg0, %c0_i32 : i32, i32
  }
}

</mosaic_0001>

<llo_original>
// kernel: tpu_custom_call.1
$region0: #{tpu_custom_call.1}
  #allocation0 [shape = 'u32[]', space=smem, size = 0x4, offset = 0x4, fixed_abs, tag = 'smem constant byte address 0x4 - core index']
  #allocation1 [shape = 'u32[144,128]{1,0:T(1,128)}', space=vmem, size = 0x12000, scoped, tag = 'internal scratch']
  %s0 = inlined_call_operand.vmem [shape: f32[24,128,16], index: 0, kind: input, shape index: {}]
  %s1 = inlined_call_operand.vmem [shape: bf16[128,384], index: 1, kind: input, shape index: {}]
  %s2 = inlined_call_operand.vmem [shape: f32[1,384], index: 2, kind: input, shape index: {}]
  %s3 = inlined_call_operand.hbm [shape: f32[24,384], index: 3, kind: output, shape index: {}]
  %s4 = sld [smem:[#allocation0]]
  $region45: #{tpu_custom_call.1} parent=0
    _
  %s6 = ssub.s32 1, %s4
  %s7 = scalar_select 0, %s6, %s4
  $region1: #{tpu_custom_call.1} parent=0
    #allocation2 [shape = 'u8[24576]{0}', space=vmem, size = 0x6000, scoped, tag = 'output window, operand 0']
    #allocation3 [shape = 's32[2]{0}', space=sflag, size = 0x8, scoped, tag = 'scoped memory for tpu_custom_call.1']
    %8 = vsyncpa [#allocation3], 0
    %s9 = scalar_lea.sflag [#allocation3], 1
    %10 = vsyncpa %s9, 0
    loop: start=0, step=1, limit=5
    $region2: #{tpu_custom_call.1} parent=1 // loop_pre_header
      _
    $region3: #{tpu_custom_call.1} parent=1 // loop_header
      %s12 = sphi 0, %s16
      %p13 = scmp.ge.s32.totalorder %s12, 5
      %s22 = sphi 0, %s24
      %s25 = sphi 0, %s22
      %s26 = sphi 0, %s25
      %s42 = sphi 0, %s26
      %s46 = sphi 0, %s46
      %s48 = sphi 0, %s46
      %s49 = sphi 0, %s48
      %s63 = sphi 0, %s49
      %s67 = sphi 0, %s67
      %s69 = sphi 0, %s67
      %s70 = sphi 0, %s69
      %s84 = sphi 0, %s70
      %s90 = sphi 0, %s92
      %s93 = sphi 0, %s90
      %s94 = sphi 0, %s93
      %s110 = sphi 0, %s94
    $region4: #{tpu_custom_call.1} parent=1 // loop_header_branch
      %15 = sbr.rel (%p13) target = $region8
    $region5: #{tpu_custom_call.1} parent=1 // loop_body
      %s17 = ssub.s32 %s12, 1
      %s18 = ssub.s32 %s12, 2
      %s19 = sadd.s32 %s12, 1
      %s20 = ssub.s32 %s12, %s19
      %p21 = scmp.eq.s32.totalorder %s20, 0
      %s23 = sadd.s32 %s22, 1
      %s24 = scalar_select %p21, %s22, %s23
      %p27 = pneg %p21
      %p28 = scmp.eq.s32.totalorder %s12, 2
      %p29 = por %p27, %p28
      %p30 = scmp.ne.s32.totalorder %s22, %s25
      %p31 = scmp.eq.s32.totalorder %s12, 0
      %p32 = por %p30, %p31
      %p33 = scmp.ne.s32.totalorder %s22, %s25
      %p34 = scmp.eq.s32.totalorder %s17, 2
      %p35 = por %p33, %p34
      %p36 = scmp.ne.s32.totalorder %s25, %s26
      %p37 = scmp.eq.s32.totalorder %s17, 0
      %p38 = por %p36, %p37
      %p39 = scmp.ne.s32.totalorder %s25, %s26
      %p40 = scmp.eq.s32.totalorder %s18, 2
      %p41 = por %p39, %p40
      %p43 = scmp.ne.s32.totalorder %s26, %s42
      %p44 = scmp.eq.s32.totalorder %s18, 0
      %p45 = por %p43, %p44
      %s47 = sadd.s32 %s46, 1
      %p50 = scmp.eq.s32.totalorder %s12, 2
      %p51 = scmp.ne.s32.totalorder %s46, %s48
      %p52 = scmp.eq.s32.totalorder %s12, 0
      %p53 = por %p51, %p52
      %p54 = scmp.ne.s32.totalorder %s46, %s48
      %p55 = scmp.eq.s32.totalorder %s17, 2
      %p56 = por %p54, %p55
      %p57 = scmp.ne.s32.totalorder %s48, %s49
      %p58 = scmp.eq.s32.totalorder %s17, 0
      %p59 = por %p57, %p58
      %p60 = scmp.ne.s32.totalorder %s48, %s49
      %p61 = scmp.eq.s32.totalorder %s18, 2
      %p62 = por %p60, %p61
      %p64 = scmp.ne.s32.totalorder %s49, %s63
      %p65 = scmp.eq.s32.totalorder %s18, 0
      %p66 = por %p64, %p65
      %s68 = sadd.s32 %s67, 1
      %p71 = scmp.eq.s32.totalorder %s12, 2
      %p72 = scmp.ne.s32.totalorder %s67, %s69
      %p73 = scmp.eq.s32.totalorder %s12, 0
      %p74 = por %p72, %p73
      %p75 = scmp.ne.s32.totalorder %s67, %s69
      %p76 = scmp.eq.s32.totalorder %s17, 2
      %p77 = por %p75, %p76
      %p78 = scmp.ne.s32.totalorder %s69, %s70
      %p79 = scmp.eq.s32.totalorder %s17, 0
      %p80 = por %p78, %p79
      %p81 = scmp.ne.s32.totalorder %s69, %s70
      %p82 = scmp.eq.s32.totalorder %s18, 2
      %p83 = por %p81, %p82
      %p85 = scmp.ne.s32.totalorder %s70, %s84
      %p86 = scmp.eq.s32.totalorder %s18, 0
      %p87 = por %p85, %p86
      %s88 = ssub.s32 %s12, %s19
      %p89 = scmp.eq.s32.totalorder %s88, 0
      %s91 = sadd.s32 %s90, 1
      %s92 = scalar_select %p89, %s90, %s91
      %p95 = pneg %p89
      %p96 = scmp.eq.s32.totalorder %s12, 2
      %p97 = por %p95, %p96
      %p98 = scmp.ne.s32.totalorder %s90, %s93
      %p99 = scmp.eq.s32.totalorder %s12, 0
      %p100 = por %p98, %p99
      %p101 = scmp.ne.s32.totalorder %s90, %s93
      %p102 = scmp.eq.s32.totalorder %s17, 2
      %p103 = por %p101, %p102
      %p104 = scmp.ne.s32.totalorder %s93, %s94
      %p105 = scmp.eq.s32.totalorder %s17, 0
      %p106 = por %p104, %p105
      %p107 = scmp.ne.s32.totalorder %s93, %s94
      %p108 = scmp.eq.s32.totalorder %s18, 2
      %p109 = por %p107, %p108
      %p111 = scmp.ne.s32.totalorder %s94, %s110
      %p112 = scmp.eq.s32.totalorder %s18, 0
      %p113 = por %p111, %p112
      %p114 = scmp.le.s32.totalorder 1, %s12
      %p115 = scmp.lt.s32.totalorder %s12, 4
      %p116 = pnand %p114, %p115
      %p117 = pneg %p116
      // Predicated region
      $region9: #{tpu_custom_call.1} parent=5 // pred_check
        _
      $region10: #{tpu_custom_call.1} parent=5 // pred_check_branch
        %119 = sbr.rel (%p116) target = $region12
      $region11: #{tpu_custom_call.1} parent=5 // pred_region
        %s120 = ssub.s32 %s12, 1
        // Predicated region
        $region13: #{tpu_custom_call.1} parent=11 // pred_check
          %p121 = pneg %p59
        $region14: #{tpu_custom_call.1} parent=11 // pred_check_branch
          %123 = sbr.rel (%p121) target = $region16
        $region15: #{tpu_custom_call.1} parent=11 // pred_region
          _
        $region16: #{tpu_custom_call.1} parent=11 // pred_fallthru
          _
        // Predicated region
        $region17: #{tpu_custom_call.1} parent=11 // pred_check
          %p124 = pneg %p80
        $region18: #{tpu_custom_call.1} parent=11 // pred_check_branch
          %126 = sbr.rel (%p124) target = $region20
        $region19: #{tpu_custom_call.1} parent=11 // pred_region
          _
        $region20: #{tpu_custom_call.1} parent=11 // pred_fallthru
          _
      $region12: #{tpu_custom_call.1} parent=5 // pred_fallthru
        _
      %p127 = scmp.lt.s32.totalorder %s12, 3
      // Predicated region
      $region21: #{tpu_custom_call.1} parent=5 // pred_check
        %p128 = pneg %p127
      $region22: #{tpu_custom_call.1} parent=5 // pred_check_branch
        %130 = sbr.rel (%p128) target = $region24
      $region23: #{tpu_custom_call.1} parent=5 // pred_region
        // Predicated region
        $region25: #{tpu_custom_call.1} parent=23 // pred_check
          %p131 = pneg %p32
        $region26: #{tpu_custom_call.1} parent=23 // pred_check_branch
          %133 = sbr.rel (%p131) target = $region28
        $region27: #{tpu_custom_call.1} parent=23 // pred_region
          %s134 = smul.u32 8, %s12
          %p135 = scmp.lt.s32.totalorder %s134, 23
          %s136 = scalar_select %p135, %s134, 23
          %s137 = smul.addr %s136, 16
          %s138 = smul.addr %s137, 8
          %s139 = scalar_lea.vmem %s0, %s138
          %s140 = smul.u32 8, %s12
        $region28: #{tpu_custom_call.1} parent=23 // pred_fallthru
          _
      $region24: #{tpu_custom_call.1} parent=5 // pred_fallthru
        _
      %p141 = scmp.le.s32.totalorder 1, %s12
      %p142 = scmp.lt.s32.totalorder %s12, 4
      %p143 = pnand %p141, %p142
      %p144 = pneg %p143
      // Predicated region
      $region29: #{tpu_custom_call.1} parent=5 // pred_check
        _
      $region30: #{tpu_custom_call.1} parent=5 // pred_check_branch
        %146 = sbr.rel (%p143) target = $region32
      $region31: #{tpu_custom_call.1} parent=5 // pred_region
        %s147 = ssub.s32 %s12, 1
        %s148 = smul.u32 8, %s17
        %p149 = scmp.lt.s32.totalorder %s148, 23
        %s150 = scalar_select %p149, %s148, 23
        %s151 = smul.addr %s150, 16
        %s152 = smul.addr %s151, 8
        %s153 = scalar_lea.vmem %s0, %s152
        %p154 = pneg %p38
        %p155 = pneg %p35
        %p156 = pneg %p59
        %p157 = pneg %p56
        %p158 = pneg %p80
        %p159 = pneg %p77
        %p160 = pneg %p106
        %p161 = pneg %p103
        %s162 = sand.u32 %s93, 1
        %s163 = scalar_lea.sflag [#allocation3], %s162
        %s164 = sand.u32 %s93, 1
        %s165 = smul.addr %s164, 24
        %s166 = scalar_lea.vmem [#allocation2], %s165
        %s167 = smul.u32 8, %s17
        %p168 = scmp.lt.s32.totalorder %s167, 23
        %s169 = scalar_select %p168, %s167, 23
        %s170 = smul.addr %s169, 16
        %s171 = smul.addr %s170, 8
        %s172 = scalar_lea.vmem %s0, %s171
        %s173 = smul.u32 8, %s17
        %v175 = vld [vmem:[%s172] sm:$0xff]
        %v176 = vld [vmem:[%s172 + $0x8] sm:$0xff]
        %v177 = vld [vmem:[%s172 + $0x10] sm:$0xff]
        %v178 = vld [vmem:[%s172 + $0x18] sm:$0xff]
        %v179 = vld [vmem:[%s172 + $0x20] sm:$0xff]
        %v180 = vld [vmem:[%s172 + $0x28] sm:$0xff]
        %v181 = vld [vmem:[%s172 + $0x30] sm:$0xff]
        %v182 = vld [vmem:[%s172 + $0x38] sm:$0xff]
        %v183 = vld [vmem:[%s172 + $0x40] sm:$0xff]
        %v184 = vld [vmem:[%s172 + $0x48] sm:$0xff]
        %v185 = vld [vmem:[%s172 + $0x50] sm:$0xff]
        %v186 = vld [vmem:[%s172 + $0x58] sm:$0xff]
        %v187 = vld [vmem:[%s172 + $0x60] sm:$0xff]
        %v188 = vld [vmem:[%s172 + $0x68] sm:$0xff]
        %v189 = vld [vmem:[%s172 + $0x70] sm:$0xff]
        %v190 = vld [vmem:[%s172 + $0x78] sm:$0xff]
        %v191 = vld [vmem:[%s172 + $0x80] sm:$0xff]
        %v192 = vld [vmem:[%s172 + $0x88] sm:$0xff]
        %v193 = vld [vmem:[%s172 + $0x90] sm:$0xff]
        %v194 = vld [vmem:[%s172 + $0x98] sm:$0xff]
        %v195 = vld [vmem:[%s172 + $0xa0] sm:$0xff]
        %v196 = vld [vmem:[%s172 + $0xa8] sm:$0xff]
        %v197 = vld [vmem:[%s172 + $0xb0] sm:$0xff]
        %v198 = vld [vmem:[%s172 + $0xb8] sm:$0xff]
        %v199 = vld [vmem:[%s172 + $0xc0] sm:$0xff]
        %v200 = vld [vmem:[%s172 + $0xc8] sm:$0xff]
        %v201 = vld [vmem:[%s172 + $0xd0] sm:$0xff]
        %v202 = vld [vmem:[%s172 + $0xd8] sm:$0xff]
        %v203 = vld [vmem:[%s172 + $0xe0] sm:$0xff]
        %v204 = vld [vmem:[%s172 + $0xe8] sm:$0xff]
        %v205 = vld [vmem:[%s172 + $0xf0] sm:$0xff]
        %v206 = vld [vmem:[%s172 + $0xf8] sm:$0xff]
        %v207 = vld [vmem:[%s172 + $0x100] sm:$0xff]
        %v208 = vld [vmem:[%s172 + $0x108] sm:$0xff]
        %v209 = vld [vmem:[%s172 + $0x110] sm:$0xff]
        %v210 = vld [vmem:[%s172 + $0x118] sm:$0xff]
        %v211 = vld [vmem:[%s172 + $0x120] sm:$0xff]
        %v212 = vld [vmem:[%s172 + $0x128] sm:$0xff]
        %v213 = vld [vmem:[%s172 + $0x130] sm:$0xff]
        %v214 = vld [vmem:[%s172 + $0x138] sm:$0xff]
        %v215 = vld [vmem:[%s172 + $0x140] sm:$0xff]
        %v216 = vld [vmem:[%s172 + $0x148] sm:$0xff]
        %v217 = vld [vmem:[%s172 + $0x150] sm:$0xff]
        %v218 = vld [vmem:[%s172 + $0x158] sm:$0xff]
        %v219 = vld [vmem:[%s172 + $0x160] sm:$0xff]
        %v220 = vld [vmem:[%s172 + $0x168] sm:$0xff]
        %v221 = vld [vmem:[%s172 + $0x170] sm:$0xff]
        %v222 = vld [vmem:[%s172 + $0x178] sm:$0xff]
        %v223 = vld [vmem:[%s172 + $0x180] sm:$0xff]
        %v224 = vld [vmem:[%s172 + $0x188] sm:$0xff]
        %v225 = vld [vmem:[%s172 + $0x190] sm:$0xff]
        %v226 = vld [vmem:[%s172 + $0x198] sm:$0xff]
        %v227 = vld [vmem:[%s172 + $0x1a0] sm:$0xff]
        %v228 = vld [vmem:[%s172 + $0x1a8] sm:$0xff]
        %v229 = vld [vmem:[%s172 + $0x1b0] sm:$0xff]
        %v230 = vld [vmem:[%s172 + $0x1b8] sm:$0xff]
        %v231 = vld [vmem:[%s172 + $0x1c0] sm:$0xff]
        %v232 = vld [vmem:[%s172 + $0x1c8] sm:$0xff]
        %v233 = vld [vmem:[%s172 + $0x1d0] sm:$0xff]
        %v234 = vld [vmem:[%s172 + $0x1d8] sm:$0xff]
        %v235 = vld [vmem:[%s172 + $0x1e0] sm:$0xff]
        %v236 = vld [vmem:[%s172 + $0x1e8] sm:$0xff]
        %v237 = vld [vmem:[%s172 + $0x1f0] sm:$0xff]
        %v238 = vld [vmem:[%s172 + $0x1f8] sm:$0xff]
        %v239 = vld [vmem:[%s172 + $0x200] sm:$0xff]
        %v240 = vld [vmem:[%s172 + $0x208] sm:$0xff]
        %v241 = vld [vmem:[%s172 + $0x210] sm:$0xff]
        %v242 = vld [vmem:[%s172 + $0x218] sm:$0xff]
        %v243 = vld [vmem:[%s172 + $0x220] sm:$0xff]
        %v244 = vld [vmem:[%s172 + $0x228] sm:$0xff]
        %v245 = vld [vmem:[%s172 + $0x230] sm:$0xff]
        %v246 = vld [vmem:[%s172 + $0x238] sm:$0xff]
        %v247 = vld [vmem:[%s172 + $0x240] sm:$0xff]
        %v248 = vld [vmem:[%s172 + $0x248] sm:$0xff]
        %v249 = vld [vmem:[%s172 + $0x250] sm:$0xff]
        %v250 = vld [vmem:[%s172 + $0x258] sm:$0xff]
        %v251 = vld [vmem:[%s172 + $0x260] sm:$0xff]
        %v252 = vld [vmem:[%s172 + $0x268] sm:$0xff]
        %v253 = vld [vmem:[%s172 + $0x270] sm:$0xff]
        %v254 = vld [vmem:[%s172 + $0x278] sm:$0xff]
        %v255 = vld [vmem:[%s172 + $0x280] sm:$0xff]
        %v256 = vld [vmem:[%s172 + $0x288] sm:$0xff]
        %v257 = vld [vmem:[%s172 + $0x290] sm:$0xff]
        %v258 = vld [vmem:[%s172 + $0x298] sm:$0xff]
        %v259 = vld [vmem:[%s172 + $0x2a0] sm:$0xff]
        %v260 = vld [vmem:[%s172 + $0x2a8] sm:$0xff]
        %v261 = vld [vmem:[%s172 + $0x2b0] sm:$0xff]
        %v262 = vld [vmem:[%s172 + $0x2b8] sm:$0xff]
        %v263 = vld [vmem:[%s172 + $0x2c0] sm:$0xff]
        %v264 = vld [vmem:[%s172 + $0x2c8] sm:$0xff]
        %v265 = vld [vmem:[%s172 + $0x2d0] sm:$0xff]
        %v266 = vld [vmem:[%s172 + $0x2d8] sm:$0xff]
        %v267 = vld [vmem:[%s172 + $0x2e0] sm:$0xff]
        %v268 = vld [vmem:[%s172 + $0x2e8] sm:$0xff]
        %v269 = vld [vmem:[%s172 + $0x2f0] sm:$0xff]
        %v270 = vld [vmem:[%s172 + $0x2f8] sm:$0xff]
        %v271 = vld [vmem:[%s172 + $0x300] sm:$0xff]
        %v272 = vld [vmem:[%s172 + $0x308] sm:$0xff]
        %v273 = vld [vmem:[%s172 + $0x310] sm:$0xff]
        %v274 = vld [vmem:[%s172 + $0x318] sm:$0xff]
        %v275 = vld [vmem:[%s172 + $0x320] sm:$0xff]
        %v276 = vld [vmem:[%s172 + $0x328] sm:$0xff]
        %v277 = vld [vmem:[%s172 + $0x330] sm:$0xff]
        %v278 = vld [vmem:[%s172 + $0x338] sm:$0xff]
        %v279 = vld [vmem:[%s172 + $0x340] sm:$0xff]
        %v280 = vld [vmem:[%s172 + $0x348] sm:$0xff]
        %v281 = vld [vmem:[%s172 + $0x350] sm:$0xff]
        %v282 = vld [vmem:[%s172 + $0x358] sm:$0xff]
        %v283 = vld [vmem:[%s172 + $0x360] sm:$0xff]
        %v284 = vld [vmem:[%s172 + $0x368] sm:$0xff]
        %v285 = vld [vmem:[%s172 + $0x370] sm:$0xff]
        %v286 = vld [vmem:[%s172 + $0x378] sm:$0xff]
        %v287 = vld [vmem:[%s172 + $0x380] sm:$0xff]
        %v288 = vld [vmem:[%s172 + $0x388] sm:$0xff]
        %v289 = vld [vmem:[%s172 + $0x390] sm:$0xff]
        %v290 = vld [vmem:[%s172 + $0x398] sm:$0xff]
        %v291 = vld [vmem:[%s172 + $0x3a0] sm:$0xff]
        %v292 = vld [vmem:[%s172 + $0x3a8] sm:$0xff]
        %v293 = vld [vmem:[%s172 + $0x3b0] sm:$0xff]
        %v294 = vld [vmem:[%s172 + $0x3b8] sm:$0xff]
        %v295 = vld [vmem:[%s172 + $0x3c0] sm:$0xff]
        %v296 = vld [vmem:[%s172 + $0x3c8] sm:$0xff]
        %v297 = vld [vmem:[%s172 + $0x3d0] sm:$0xff]
        %v298 = vld [vmem:[%s172 + $0x3d8] sm:$0xff]
        %v299 = vld [vmem:[%s172 + $0x3e0] sm:$0xff]
        %v300 = vld [vmem:[%s172 + $0x3e8] sm:$0xff]
        %v301 = vld [vmem:[%s172 + $0x3f0] sm:$0xff]
        %v302 = vld [vmem:[%s172 + $0x3f8] sm:$0xff]
        %vm303 = vcmask 130048
        %v304 = vsel %vm303, %v175, 0.0
        %305 = vadd.xlane.f32.xlu0 %v304
        %v306 = vpop.xlane.xlu0 %305
        %v307 = vsel %vm303, %v176, 0.0
        %308 = vadd.xlane.f32.xlu0 %v307
        %v309 = vpop.xlane.xlu0 %308
        %v310 = vsel %vm303, %v177, 0.0
        %311 = vadd.xlane.f32.xlu0 %v310
        %v312 = vpop.xlane.xlu0 %311
        %v313 = vsel %vm303, %v178, 0.0
        %314 = vadd.xlane.f32.xlu0 %v313
        %v315 = vpop.xlane.xlu0 %314
        %v316 = vsel %vm303, %v179, 0.0
        %317 = vadd.xlane.f32.xlu0 %v316
        %v318 = vpop.xlane.xlu0 %317
        %v319 = vsel %vm303, %v180, 0.0
        %320 = vadd.xlane.f32.xlu0 %v319
        %v321 = vpop.xlane.xlu0 %320
        %v322 = vsel %vm303, %v181, 0.0
        %323 = vadd.xlane.f32.xlu0 %v322
        %v324 = vpop.xlane.xlu0 %323
        %v325 = vsel %vm303, %v182, 0.0
        %326 = vadd.xlane.f32.xlu0 %v325
        %v327 = vpop.xlane.xlu0 %326
        %v328 = vsel %vm303, %v183, 0.0
        %329 = vadd.xlane.f32.xlu0 %v328
        %v330 = vpop.xlane.xlu0 %329
        %v331 = vsel %vm303, %v184, 0.0
        %332 = vadd.xlane.f32.xlu0 %v331
        %v333 = vpop.xlane.xlu0 %332
        %v334 = vsel %vm303, %v185, 0.0
        %335 = vadd.xlane.f32.xlu0 %v334
        %v336 = vpop.xlane.xlu0 %335
        %v337 = vsel %vm303, %v186, 0.0
        %338 = vadd.xlane.f32.xlu0 %v337
        %v339 = vpop.xlane.xlu0 %338
        %v340 = vsel %vm303, %v187, 0.0
        %341 = vadd.xlane.f32.xlu0 %v340
        %v342 = vpop.xlane.xlu0 %341
        %v343 = vsel %vm303, %v188, 0.0
        %344 = vadd.xlane.f32.xlu0 %v343
        %v345 = vpop.xlane.xlu0 %344
        %v346 = vsel %vm303, %v189, 0.0
        %347 = vadd.xlane.f32.xlu0 %v346
        %v348 = vpop.xlane.xlu0 %347
        %v349 = vsel %vm303, %v190, 0.0
        %350 = vadd.xlane.f32.xlu0 %v349
        %v351 = vpop.xlane.xlu0 %350
        %v352 = vsel %vm303, %v191, 0.0
        %353 = vadd.xlane.f32.xlu0 %v352
        %v354 = vpop.xlane.xlu0 %353
        %v355 = vsel %vm303, %v192, 0.0
        %356 = vadd.xlane.f32.xlu0 %v355
        %v357 = vpop.xlane.xlu0 %356
        %v358 = vsel %vm303, %v193, 0.0
        %359 = vadd.xlane.f32.xlu0 %v358
        %v360 = vpop.xlane.xlu0 %359
        %v361 = vsel %vm303, %v194, 0.0
        %362 = vadd.xlane.f32.xlu0 %v361
        %v363 = vpop.xlane.xlu0 %362
        %v364 = vsel %vm303, %v195, 0.0
        %365 = vadd.xlane.f32.xlu0 %v364
        %v366 = vpop.xlane.xlu0 %365
        %v367 = vsel %vm303, %v196, 0.0
        %368 = vadd.xlane.f32.xlu0 %v367
        %v369 = vpop.xlane.xlu0 %368
        %v370 = vsel %vm303, %v197, 0.0
        %371 = vadd.xlane.f32.xlu0 %v370
        %v372 = vpop.xlane.xlu0 %371
        %v373 = vsel %vm303, %v198, 0.0
        %374 = vadd.xlane.f32.xlu0 %v373
        %v375 = vpop.xlane.xlu0 %374
        %v376 = vsel %vm303, %v199, 0.0
        %377 = vadd.xlane.f32.xlu0 %v376
        %v378 = vpop.xlane.xlu0 %377
        %v379 = vsel %vm303, %v200, 0.0
        %380 = vadd.xlane.f32.xlu0 %v379
        %v381 = vpop.xlane.xlu0 %380
        %v382 = vsel %vm303, %v201, 0.0
        %383 = vadd.xlane.f32.xlu0 %v382
        %v384 = vpop.xlane.xlu0 %383
        %v385 = vsel %vm303, %v202, 0.0
        %386 = vadd.xlane.f32.xlu0 %v385
        %v387 = vpop.xlane.xlu0 %386
        %v388 = vsel %vm303, %v203, 0.0
        %389 = vadd.xlane.f32.xlu0 %v388
        %v390 = vpop.xlane.xlu0 %389
        %v391 = vsel %vm303, %v204, 0.0
        %392 = vadd.xlane.f32.xlu0 %v391
        %v393 = vpop.xlane.xlu0 %392
        %v394 = vsel %vm303, %v205, 0.0
        %395 = vadd.xlane.f32.xlu0 %v394
        %v396 = vpop.xlane.xlu0 %395
        %v397 = vsel %vm303, %v206, 0.0
        %398 = vadd.xlane.f32.xlu0 %v397
        %v399 = vpop.xlane.xlu0 %398
        %v400 = vsel %vm303, %v207, 0.0
        %401 = vadd.xlane.f32.xlu0 %v400
        %v402 = vpop.xlane.xlu0 %401
        %v403 = vsel %vm303, %v208, 0.0
        %404 = vadd.xlane.f32.xlu0 %v403
        %v405 = vpop.xlane.xlu0 %404
        %v406 = vsel %vm303, %v209, 0.0
        %407 = vadd.xlane.f32.xlu0 %v406
        %v408 = vpop.xlane.xlu0 %407
        %v409 = vsel %vm303, %v210, 0.0
        %410 = vadd.xlane.f32.xlu0 %v409
        %v411 = vpop.xlane.xlu0 %410
        %v412 = vsel %vm303, %v211, 0.0
        %413 = vadd.xlane.f32.xlu0 %v412
        %v414 = vpop.xlane.xlu0 %413
        %v415 = vsel %vm303, %v212, 0.0
        %416 = vadd.xlane.f32.xlu0 %v415
        %v417 = vpop.xlane.xlu0 %416
        %v418 = vsel %vm303, %v213, 0.0
        %419 = vadd.xlane.f32.xlu0 %v418
        %v420 = vpop.xlane.xlu0 %419
        %v421 = vsel %vm303, %v214, 0.0
        %422 = vadd.xlane.f32.xlu0 %v421
        %v423 = vpop.xlane.xlu0 %422
        %v424 = vsel %vm303, %v215, 0.0
        %425 = vadd.xlane.f32.xlu0 %v424
        %v426 = vpop.xlane.xlu0 %425
        %v427 = vsel %vm303, %v216, 0.0
        %428 = vadd.xlane.f32.xlu0 %v427
        %v429 = vpop.xlane.xlu0 %428
        %v430 = vsel %vm303, %v217, 0.0
        %431 = vadd.xlane.f32.xlu0 %v430
        %v432 = vpop.xlane.xlu0 %431
        %v433 = vsel %vm303, %v218, 0.0
        %434 = vadd.xlane.f32.xlu0 %v433
        %v435 = vpop.xlane.xlu0 %434
        %v436 = vsel %vm303, %v219, 0.0
        %437 = vadd.xlane.f32.xlu0 %v436
        %v438 = vpop.xlane.xlu0 %437
        %v439 = vsel %vm303, %v220, 0.0
        %440 = vadd.xlane.f32.xlu0 %v439
        %v441 = vpop.xlane.xlu0 %440
        %v442 = vsel %vm303, %v221, 0.0
        %443 = vadd.xlane.f32.xlu0 %v442
        %v444 = vpop.xlane.xlu0 %443
        %v445 = vsel %vm303, %v222, 0.0
        %446 = vadd.xlane.f32.xlu0 %v445
        %v447 = vpop.xlane.xlu0 %446
        %v448 = vsel %vm303, %v223, 0.0
        %449 = vadd.xlane.f32.xlu0 %v448
        %v450 = vpop.xlane.xlu0 %449
        %v451 = vsel %vm303, %v224, 0.0
        %452 = vadd.xlane.f32.xlu0 %v451
        %v453 = vpop.xlane.xlu0 %452
        %v454 = vsel %vm303, %v225, 0.0
        %455 = vadd.xlane.f32.xlu0 %v454
        %v456 = vpop.xlane.xlu0 %455
        %v457 = vsel %vm303, %v226, 0.0
        %458 = vadd.xlane.f32.xlu0 %v457
        %v459 = vpop.xlane.xlu0 %458
        %v460 = vsel %vm303, %v227, 0.0
        %461 = vadd.xlane.f32.xlu0 %v460
        %v462 = vpop.xlane.xlu0 %461
        %v463 = vsel %vm303, %v228, 0.0
        %464 = vadd.xlane.f32.xlu0 %v463
        %v465 = vpop.xlane.xlu0 %464
        %v466 = vsel %vm303, %v229, 0.0
        %467 = vadd.xlane.f32.xlu0 %v466
        %v468 = vpop.xlane.xlu0 %467
        %v469 = vsel %vm303, %v230, 0.0
        %470 = vadd.xlane.f32.xlu0 %v469
        %v471 = vpop.xlane.xlu0 %470
        %v472 = vsel %vm303, %v231, 0.0
        %473 = vadd.xlane.f32.xlu0 %v472
        %v474 = vpop.xlane.xlu0 %473
        %v475 = vsel %vm303, %v232, 0.0
        %476 = vadd.xlane.f32.xlu0 %v475
        %v477 = vpop.xlane.xlu0 %476
        %v478 = vsel %vm303, %v233, 0.0
        %479 = vadd.xlane.f32.xlu0 %v478
        %v480 = vpop.xlane.xlu0 %479
        %v481 = vsel %vm303, %v234, 0.0
        %482 = vadd.xlane.f32.xlu0 %v481
        %v483 = vpop.xlane.xlu0 %482
        %v484 = vsel %vm303, %v235, 0.0
        %485 = vadd.xlane.f32.xlu0 %v484
        %v486 = vpop.xlane.xlu0 %485
        %v487 = vsel %vm303, %v236, 0.0
        %488 = vadd.xlane.f32.xlu0 %v487
        %v489 = vpop.xlane.xlu0 %488
        %v490 = vsel %vm303, %v237, 0.0
        %491 = vadd.xlane.f32.xlu0 %v490
        %v492 = vpop.xlane.xlu0 %491
        %v493 = vsel %vm303, %v238, 0.0
        %494 = vadd.xlane.f32.xlu0 %v493
        %v495 = vpop.xlane.xlu0 %494
        %v496 = vsel %vm303, %v239, 0.0
        %497 = vadd.xlane.f32.xlu0 %v496
        %v498 = vpop.xlane.xlu0 %497
        %v499 = vsel %vm303, %v240, 0.0
        %500 = vadd.xlane.f32.xlu0 %v499
        %v501 = vpop.xlane.xlu0 %500
        %v502 = vsel %vm303, %v241, 0.0
        %503 = vadd.xlane.f32.xlu0 %v502
        %v504 = vpop.xlane.xlu0 %503
        %v505 = vsel %vm303, %v242, 0.0
        %506 = vadd.xlane.f32.xlu0 %v505
        %v507 = vpop.xlane.xlu0 %506
        %v508 = vsel %vm303, %v243, 0.0
        %509 = vadd.xlane.f32.xlu0 %v508
        %v510 = vpop.xlane.xlu0 %509
        %v511 = vsel %vm303, %v244, 0.0
        %512 = vadd.xlane.f32.xlu0 %v511
        %v513 = vpop.xlane.xlu0 %512
        %v514 = vsel %vm303, %v245, 0.0
        %515 = vadd.xlane.f32.xlu0 %v514
        %v516 = vpop.xlane.xlu0 %515
        %v517 = vsel %vm303, %v246, 0.0
        %518 = vadd.xlane.f32.xlu0 %v517
        %v519 = vpop.xlane.xlu0 %518
        %v520 = vsel %vm303, %v247, 0.0
        %521 = vadd.xlane.f32.xlu0 %v520
        %v522 = vpop.xlane.xlu0 %521
        %v523 = vsel %vm303, %v248, 0.0
        %524 = vadd.xlane.f32.xlu0 %v523
        %v525 = vpop.xlane.xlu0 %524
        %v526 = vsel %vm303, %v249, 0.0
        %527 = vadd.xlane.f32.xlu0 %v526
        %v528 = vpop.xlane.xlu0 %527
        %v529 = vsel %vm303, %v250, 0.0
        %530 = vadd.xlane.f32.xlu0 %v529
        %v531 = vpop.xlane.xlu0 %530
        %v532 = vsel %vm303, %v251, 0.0
        %533 = vadd.xlane.f32.xlu0 %v532
        %v534 = vpop.xlane.xlu0 %533
        %v535 = vsel %vm303, %v252, 0.0
        %536 = vadd.xlane.f32.xlu0 %v535
        %v537 = vpop.xlane.xlu0 %536
        %v538 = vsel %vm303, %v253, 0.0
        %539 = vadd.xlane.f32.xlu0 %v538
        %v540 = vpop.xlane.xlu0 %539
        %v541 = vsel %vm303, %v254, 0.0
        %542 = vadd.xlane.f32.xlu0 %v541
        %v543 = vpop.xlane.xlu0 %542
        %v544 = vsel %vm303, %v255, 0.0
        %545 = vadd.xlane.f32.xlu0 %v544
        %v546 = vpop.xlane.xlu0 %545
        %v547 = vsel %vm303, %v256, 0.0
        %548 = vadd.xlane.f32.xlu0 %v547
        %v549 = vpop.xlane.xlu0 %548
        %v550 = vsel %vm303, %v257, 0.0
        %551 = vadd.xlane.f32.xlu0 %v550
        %v552 = vpop.xlane.xlu0 %551
        %v553 = vsel %vm303, %v258, 0.0
        %554 = vadd.xlane.f32.xlu0 %v553
        %v555 = vpop.xlane.xlu0 %554
        %v556 = vsel %vm303, %v259, 0.0
        %557 = vadd.xlane.f32.xlu0 %v556
        %v558 = vpop.xlane.xlu0 %557
        %v559 = vsel %vm303, %v260, 0.0
        %560 = vadd.xlane.f32.xlu0 %v559
        %v561 = vpop.xlane.xlu0 %560
        %v562 = vsel %vm303, %v261, 0.0
        %563 = vadd.xlane.f32.xlu0 %v562
        %v564 = vpop.xlane.xlu0 %563
        %v565 = vsel %vm303, %v262, 0.0
        %566 = vadd.xlane.f32.xlu0 %v565
        %v567 = vpop.xlane.xlu0 %566
        %v568 = vsel %vm303, %v263, 0.0
        %569 = vadd.xlane.f32.xlu0 %v568
        %v570 = vpop.xlane.xlu0 %569
        %v571 = vsel %vm303, %v264, 0.0
        %572 = vadd.xlane.f32.xlu0 %v571
        %v573 = vpop.xlane.xlu0 %572
        %v574 = vsel %vm303, %v265, 0.0
        %575 = vadd.xlane.f32.xlu0 %v574
        %v576 = vpop.xlane.xlu0 %575
        %v577 = vsel %vm303, %v266, 0.0
        %578 = vadd.xlane.f32.xlu0 %v577
        %v579 = vpop.xlane.xlu0 %578
        %v580 = vsel %vm303, %v267, 0.0
        %581 = vadd.xlane.f32.xlu0 %v580
        %v582 = vpop.xlane.xlu0 %581
        %v583 = vsel %vm303, %v268, 0.0
        %584 = vadd.xlane.f32.xlu0 %v583
        %v585 = vpop.xlane.xlu0 %584
        %v586 = vsel %vm303, %v269, 0.0
        %587 = vadd.xlane.f32.xlu0 %v586
        %v588 = vpop.xlane.xlu0 %587
        %v589 = vsel %vm303, %v270, 0.0
        %590 = vadd.xlane.f32.xlu0 %v589
        %v591 = vpop.xlane.xlu0 %590
        %v592 = vsel %vm303, %v271, 0.0
        %593 = vadd.xlane.f32.xlu0 %v592
        %v594 = vpop.xlane.xlu0 %593
        %v595 = vsel %vm303, %v272, 0.0
        %596 = vadd.xlane.f32.xlu0 %v595
        %v597 = vpop.xlane.xlu0 %596
        %v598 = vsel %vm303, %v273, 0.0
        %599 = vadd.xlane.f32.xlu0 %v598
        %v600 = vpop.xlane.xlu0 %599
        %v601 = vsel %vm303, %v274, 0.0
        %602 = vadd.xlane.f32.xlu0 %v601
        %v603 = vpop.xlane.xlu0 %602
        %v604 = vsel %vm303, %v275, 0.0
        %605 = vadd.xlane.f32.xlu0 %v604
        %v606 = vpop.xlane.xlu0 %605
        %v607 = vsel %vm303, %v276, 0.0
        %608 = vadd.xlane.f32.xlu0 %v607
        %v609 = vpop.xlane.xlu0 %608
        %v610 = vsel %vm303, %v277, 0.0
        %611 = vadd.xlane.f32.xlu0 %v610
        %v612 = vpop.xlane.xlu0 %611
        %v613 = vsel %vm303, %v278, 0.0
        %614 = vadd.xlane.f32.xlu0 %v613
        %v615 = vpop.xlane.xlu0 %614
        %v616 = vsel %vm303, %v279, 0.0
        %617 = vadd.xlane.f32.xlu0 %v616
        %v618 = vpop.xlane.xlu0 %617
        %v619 = vsel %vm303, %v280, 0.0
        %620 = vadd.xlane.f32.xlu0 %v619
        %v621 = vpop.xlane.xlu0 %620
        %v622 = vsel %vm303, %v281, 0.0
        %623 = vadd.xlane.f32.xlu0 %v622
        %v624 = vpop.xlane.xlu0 %623
        %v625 = vsel %vm303, %v282, 0.0
        %626 = vadd.xlane.f32.xlu0 %v625
        %v627 = vpop.xlane.xlu0 %626
        %v628 = vsel %vm303, %v283, 0.0
        %629 = vadd.xlane.f32.xlu0 %v628
        %v630 = vpop.xlane.xlu0 %629
        %v631 = vsel %vm303, %v284, 0.0
        %632 = vadd.xlane.f32.xlu0 %v631
        %v633 = vpop.xlane.xlu0 %632
        %v634 = vsel %vm303, %v285, 0.0
        %635 = vadd.xlane.f32.xlu0 %v634
        %v636 = vpop.xlane.xlu0 %635
        %v637 = vsel %vm303, %v286, 0.0
        %638 = vadd.xlane.f32.xlu0 %v637
        %v639 = vpop.xlane.xlu0 %638
        %v640 = vsel %vm303, %v287, 0.0
        %641 = vadd.xlane.f32.xlu0 %v640
        %v642 = vpop.xlane.xlu0 %641
        %v643 = vsel %vm303, %v288, 0.0
        %644 = vadd.xlane.f32.xlu0 %v643
        %v645 = vpop.xlane.xlu0 %644
        %v646 = vsel %vm303, %v289, 0.0
        %647 = vadd.xlane.f32.xlu0 %v646
        %v648 = vpop.xlane.xlu0 %647
        %v649 = vsel %vm303, %v290, 0.0
        %650 = vadd.xlane.f32.xlu0 %v649
        %v651 = vpop.xlane.xlu0 %650
        %v652 = vsel %vm303, %v291, 0.0
        %653 = vadd.xlane.f32.xlu0 %v652
        %v654 = vpop.xlane.xlu0 %653
        %v655 = vsel %vm303, %v292, 0.0
        %656 = vadd.xlane.f32.xlu0 %v655
        %v657 = vpop.xlane.xlu0 %656
        %v658 = vsel %vm303, %v293, 0.0
        %659 = vadd.xlane.f32.xlu0 %v658
        %v660 = vpop.xlane.xlu0 %659
        %v661 = vsel %vm303, %v294, 0.0
        %662 = vadd.xlane.f32.xlu0 %v661
        %v663 = vpop.xlane.xlu0 %662
        %v664 = vsel %vm303, %v295, 0.0
        %665 = vadd.xlane.f32.xlu0 %v664
        %v666 = vpop.xlane.xlu0 %665
        %v667 = vsel %vm303, %v296, 0.0
        %668 = vadd.xlane.f32.xlu0 %v667
        %v669 = vpop.xlane.xlu0 %668
        %v670 = vsel %vm303, %v297, 0.0
        %671 = vadd.xlane.f32.xlu0 %v670
        %v672 = vpop.xlane.xlu0 %671
        %v673 = vsel %vm303, %v298, 0.0
        %674 = vadd.xlane.f32.xlu0 %v673
        %v675 = vpop.xlane.xlu0 %674
        %v676 = vsel %vm303, %v299, 0.0
        %677 = vadd.xlane.f32.xlu0 %v676
        %v678 = vpop.xlane.xlu0 %677
        %v679 = vsel %vm303, %v300, 0.0
        %680 = vadd.xlane.f32.xlu0 %v679
        %v681 = vpop.xlane.xlu0 %680
        %v682 = vsel %vm303, %v301, 0.0
        %683 = vadd.xlane.f32.xlu0 %v682
        %v684 = vpop.xlane.xlu0 %683
        %v685 = vsel %vm303, %v302, 0.0
        %686 = vadd.xlane.f32.xlu0 %v685
        %v687 = vpop.xlane.xlu0 %686
        %v688 = vrcp.pop 16.0
        %v689 = vmul.f32 %v306, %v688
        %v690 = vmul.f32 %v309, %v688
        %v691 = vmul.f32 %v312, %v688
        %v692 = vmul.f32 %v315, %v688
        %v693 = vmul.f32 %v318, %v688
        %v694 = vmul.f32 %v321, %v688
        %v695 = vmul.f32 %v324, %v688
        %v696 = vmul.f32 %v327, %v688
        %v697 = vmul.f32 %v330, %v688
        %v698 = vmul.f32 %v333, %v688
        %v699 = vmul.f32 %v336, %v688
        %v700 = vmul.f32 %v339, %v688
        %v701 = vmul.f32 %v342, %v688
        %v702 = vmul.f32 %v345, %v688
        %v703 = vmul.f32 %v348, %v688
        %v704 = vmul.f32 %v351, %v688
        %v705 = vmul.f32 %v354, %v688
        %v706 = vmul.f32 %v357, %v688
        %v707 = vmul.f32 %v360, %v688
        %v708 = vmul.f32 %v363, %v688
        %v709 = vmul.f32 %v366, %v688
        %v710 = vmul.f32 %v369, %v688
        %v711 = vmul.f32 %v372, %v688
        %v712 = vmul.f32 %v375, %v688
        %v713 = vmul.f32 %v378, %v688
        %v714 = vmul.f32 %v381, %v688
        %v715 = vmul.f32 %v384, %v688
        %v716 = vmul.f32 %v387, %v688
        %v717 = vmul.f32 %v390, %v688
        %v718 = vmul.f32 %v393, %v688
        %v719 = vmul.f32 %v396, %v688
        %v720 = vmul.f32 %v399, %v688
        %v721 = vmul.f32 %v402, %v688
        %v722 = vmul.f32 %v405, %v688
        %v723 = vmul.f32 %v408, %v688
        %v724 = vmul.f32 %v411, %v688
        %v725 = vmul.f32 %v414, %v688
        %v726 = vmul.f32 %v417, %v688
        %v727 = vmul.f32 %v420, %v688
        %v728 = vmul.f32 %v423, %v688
        %v729 = vmul.f32 %v426, %v688
        %v730 = vmul.f32 %v429, %v688
        %v731 = vmul.f32 %v432, %v688
        %v732 = vmul.f32 %v435, %v688
        %v733 = vmul.f32 %v438, %v688
        %v734 = vmul.f32 %v441, %v688
        %v735 = vmul.f32 %v444, %v688
        %v736 = vmul.f32 %v447, %v688
        %v737 = vmul.f32 %v450, %v688
        %v738 = vmul.f32 %v453, %v688
        %v739 = vmul.f32 %v456, %v688
        %v740 = vmul.f32 %v459, %v688
        %v741 = vmul.f32 %v462, %v688
        %v742 = vmul.f32 %v465, %v688
        %v743 = vmul.f32 %v468, %v688
        %v744 = vmul.f32 %v471, %v688
        %v745 = vmul.f32 %v474, %v688
        %v746 = vmul.f32 %v477, %v688
        %v747 = vmul.f32 %v480, %v688
        %v748 = vmul.f32 %v483, %v688
        %v749 = vmul.f32 %v486, %v688
        %v750 = vmul.f32 %v489, %v688
        %v751 = vmul.f32 %v492, %v688
        %v752 = vmul.f32 %v495, %v688
        %v753 = vmul.f32 %v498, %v688
        %v754 = vmul.f32 %v501, %v688
        %v755 = vmul.f32 %v504, %v688
        %v756 = vmul.f32 %v507, %v688
        %v757 = vmul.f32 %v510, %v688
        %v758 = vmul.f32 %v513, %v688
        %v759 = vmul.f32 %v516, %v688
        %v760 = vmul.f32 %v519, %v688
        %v761 = vmul.f32 %v522, %v688
        %v762 = vmul.f32 %v525, %v688
        %v763 = vmul.f32 %v528, %v688
        %v764 = vmul.f32 %v531, %v688
        %v765 = vmul.f32 %v534, %v688
        %v766 = vmul.f32 %v537, %v688
        %v767 = vmul.f32 %v540, %v688
        %v768 = vmul.f32 %v543, %v688
        %v769 = vmul.f32 %v546, %v688
        %v770 = vmul.f32 %v549, %v688
        %v771 = vmul.f32 %v552, %v688
        %v772 = vmul.f32 %v555, %v688
        %v773 = vmul.f32 %v558, %v688
        %v774 = vmul.f32 %v561, %v688
        %v775 = vmul.f32 %v564, %v688
        %v776 = vmul.f32 %v567, %v688
        %v777 = vmul.f32 %v570, %v688
        %v778 = vmul.f32 %v573, %v688
        %v779 = vmul.f32 %v576, %v688
        %v780 = vmul.f32 %v579, %v688
        %v781 = vmul.f32 %v582, %v688
        %v782 = vmul.f32 %v585, %v688
        %v783 = vmul.f32 %v588, %v688
        %v784 = vmul.f32 %v591, %v688
        %v785 = vmul.f32 %v594, %v688
        %v786 = vmul.f32 %v597, %v688
        %v787 = vmul.f32 %v600, %v688
        %v788 = vmul.f32 %v603, %v688
        %v789 = vmul.f32 %v606, %v688
        %v790 = vmul.f32 %v609, %v688
        %v791 = vmul.f32 %v612, %v688
        %v792 = vmul.f32 %v615, %v688
        %v793 = vmul.f32 %v618, %v688
        %v794 = vmul.f32 %v621, %v688
        %v795 = vmul.f32 %v624, %v688
        %v796 = vmul.f32 %v627, %v688
        %v797 = vmul.f32 %v630, %v688
        %v798 = vmul.f32 %v633, %v688
        %v799 = vmul.f32 %v636, %v688
        %v800 = vmul.f32 %v639, %v688
        %v801 = vmul.f32 %v642, %v688
        %v802 = vmul.f32 %v645, %v688
        %v803 = vmul.f32 %v648, %v688
        %v804 = vmul.f32 %v651, %v688
        %v805 = vmul.f32 %v654, %v688
        %v806 = vmul.f32 %v657, %v688
        %v807 = vmul.f32 %v660, %v688
        %v808 = vmul.f32 %v663, %v688
        %v809 = vmul.f32 %v666, %v688
        %v810 = vmul.f32 %v669, %v688
        %v811 = vmul.f32 %v672, %v688
        %v812 = vmul.f32 %v675, %v688
        %v813 = vmul.f32 %v678, %v688
        %v814 = vmul.f32 %v681, %v688
        %v815 = vmul.f32 %v684, %v688
        %v816 = vmul.f32 %v687, %v688
        %v817 = vpack.c.bf16 %v690, %v689
        %v818 = vpack.c.bf16 %v692, %v691
        %v819 = vpack.c.bf16 %v694, %v693
        %v820 = vpack.c.bf16 %v696, %v695
        %v821 = vpack.c.bf16 %v698, %v697
        %v822 = vpack.c.bf16 %v700, %v699
        %v823 = vpack.c.bf16 %v702, %v701
        %v824 = vpack.c.bf16 %v704, %v703
        %v825 = vpack.c.bf16 %v706, %v705
        %v826 = vpack.c.bf16 %v708, %v707
        %v827 = vpack.c.bf16 %v710, %v709
        %v828 = vpack.c.bf16 %v712, %v711
        %v829 = vpack.c.bf16 %v714, %v713
        %v830 = vpack.c.bf16 %v716, %v715
        %v831 = vpack.c.bf16 %v718, %v717
        %v832 = vpack.c.bf16 %v720, %v719
        %v833 = vpack.c.bf16 %v722, %v721
        %v834 = vpack.c.bf16 %v724, %v723
        %v835 = vpack.c.bf16 %v726, %v725
        %v836 = vpack.c.bf16 %v728, %v727
        %v837 = vpack.c.bf16 %v730, %v729
        %v838 = vpack.c.bf16 %v732, %v731
        %v839 = vpack.c.bf16 %v734, %v733
        %v840 = vpack.c.bf16 %v736, %v735
        %v841 = vpack.c.bf16 %v738, %v737
        %v842 = vpack.c.bf16 %v740, %v739
        %v843 = vpack.c.bf16 %v742, %v741
        %v844 = vpack.c.bf16 %v744, %v743
        %v845 = vpack.c.bf16 %v746, %v745
        %v846 = vpack.c.bf16 %v748, %v747
        %v847 = vpack.c.bf16 %v750, %v749
        %v848 = vpack.c.bf16 %v752, %v751
        %v849 = vpack.c.bf16 %v754, %v753
        %v850 = vpack.c.bf16 %v756, %v755
        %v851 = vpack.c.bf16 %v758, %v757
        %v852 = vpack.c.bf16 %v760, %v759
        %v853 = vpack.c.bf16 %v762, %v761
        %v854 = vpack.c.bf16 %v764, %v763
        %v855 = vpack.c.bf16 %v766, %v765
        %v856 = vpack.c.bf16 %v768, %v767
        %v857 = vpack.c.bf16 %v770, %v769
        %v858 = vpack.c.bf16 %v772, %v771
        %v859 = vpack.c.bf16 %v774, %v773
        %v860 = vpack.c.bf16 %v776, %v775
        %v861 = vpack.c.bf16 %v778, %v777
        %v862 = vpack.c.bf16 %v780, %v779
        %v863 = vpack.c.bf16 %v782, %v781
        %v864 = vpack.c.bf16 %v784, %v783
        %v865 = vpack.c.bf16 %v786, %v785
        %v866 = vpack.c.bf16 %v788, %v787
        %v867 = vpack.c.bf16 %v790, %v789
        %v868 = vpack.c.bf16 %v792, %v791
        %v869 = vpack.c.bf16 %v794, %v793
        %v870 = vpack.c.bf16 %v796, %v795
        %v871 = vpack.c.bf16 %v798, %v797
        %v872 = vpack.c.bf16 %v800, %v799
        %v873 = vpack.c.bf16 %v802, %v801
        %v874 = vpack.c.bf16 %v804, %v803
        %v875 = vpack.c.bf16 %v806, %v805
        %v876 = vpack.c.bf16 %v808, %v807
        %v877 = vpack.c.bf16 %v810, %v809
        %v878 = vpack.c.bf16 %v812, %v811
        %v879 = vpack.c.bf16 %v814, %v813
        %v880 = vpack.c.bf16 %v816, %v815
        %v881 = vld [vmem:[%s1] sm:$0xff]
        %v882 = vld [vmem:[%s1 + $0x8] sm:$0xf]
        %v883 = vld [vmem:[%s1 + $0xc] sm:$0xff]
        %v884 = vld [vmem:[%s1 + $0x14] sm:$0xf]
        %v885 = vld [vmem:[%s1 + $0x18] sm:$0xff]
        %v886 = vld [vmem:[%s1 + $0x20] sm:$0xf]
        %v887 = vld [vmem:[%s1 + $0x24] sm:$0xff]
        %v888 = vld [vmem:[%s1 + $0x2c] sm:$0xf]
        %v889 = vld [vmem:[%s1 + $0x30] sm:$0xff]
        %v890 = vld [vmem:[%s1 + $0x38] sm:$0xf]
        %v891 = vld [vmem:[%s1 + $0x3c] sm:$0xff]
        %v892 = vld [vmem:[%s1 + $0x44] sm:$0xf]
        %v893 = vld [vmem:[%s1 + $0x48] sm:$0xff]
        %v894 = vld [vmem:[%s1 + $0x50] sm:$0xf]
        %v895 = vld [vmem:[%s1 + $0x54] sm:$0xff]
        %v896 = vld [vmem:[%s1 + $0x5c] sm:$0xf]
        %v897 = vld [vmem:[%s1 + $0x60] sm:$0xff]
        %v898 = vld [vmem:[%s1 + $0x68] sm:$0xf]
        %v899 = vld [vmem:[%s1 + $0x6c] sm:$0xff]
        %v900 = vld [vmem:[%s1 + $0x74] sm:$0xf]
        %v901 = vld [vmem:[%s1 + $0x78] sm:$0xff]
        %v902 = vld [vmem:[%s1 + $0x80] sm:$0xf]
        %v903 = vld [vmem:[%s1 + $0x84] sm:$0xff]
        %v904 = vld [vmem:[%s1 + $0x8c] sm:$0xf]
        %v905 = vld [vmem:[%s1 + $0x90] sm:$0xff]
        %v906 = vld [vmem:[%s1 + $0x98] sm:$0xf]
        %v907 = vld [vmem:[%s1 + $0x9c] sm:$0xff]
        %v908 = vld [vmem:[%s1 + $0xa4] sm:$0xf]
        %v909 = vld [vmem:[%s1 + $0xa8] sm:$0xff]
        %v910 = vld [vmem:[%s1 + $0xb0] sm:$0xf]
        %v911 = vld [vmem:[%s1 + $0xb4] sm:$0xff]
        %v912 = vld [vmem:[%s1 + $0xbc] sm:$0xf]
        %v913 = vld [vmem:[%s2] sm:$0x7]
        %v915 = vlaneseq
        %v916 = vshrl.u32 %v915, 7
        %v917 = vsub.s32 0, %v916
        %v918 = vrot.slane %v913, %v917
        %v919 = vlaneseq
        %v920 = vshrl.u32 %v919, 7
        %v921 = vsub.s32 1, %v920
        %v922 = vrot.slane %v913, %v921
        %v923 = vlaneseq
        %v924 = vshrl.u32 %v923, 7
        %v925 = vsub.s32 2, %v924
        %v926 = vrot.slane %v913, %v925
        %v994 = vunpack.c.l.b16 %v817
        %v995 = vunpack.c.h.b16 %v817
        %v996 = vunpack.c.l.b16 %v818
        %v997 = vunpack.c.h.b16 %v818
        %v998 = vunpack.c.l.b16 %v819
        %v999 = vunpack.c.h.b16 %v819
        %v1000 = vunpack.c.l.b16 %v820
        %v1001 = vunpack.c.h.b16 %v820
        %v1002 = vunpack.c.l.b16 %v821
        %v1003 = vunpack.c.h.b16 %v821
        %v1004 = vunpack.c.l.b16 %v822
        %v1005 = vunpack.c.h.b16 %v822
        %v1006 = vunpack.c.l.b16 %v823
        %v1007 = vunpack.c.h.b16 %v823
        %v1008 = vunpack.c.l.b16 %v824
        %v1009 = vunpack.c.h.b16 %v824
        %v1010 = vunpack.c.l.b16 %v825
        %v1011 = vunpack.c.h.b16 %v825
        %v1012 = vunpack.c.l.b16 %v826
        %v1013 = vunpack.c.h.b16 %v826
        %v1014 = vunpack.c.l.b16 %v827
        %v1015 = vunpack.c.h.b16 %v827
        %v1016 = vunpack.c.l.b16 %v828
        %v1017 = vunpack.c.h.b16 %v828
        %v1018 = vunpack.c.l.b16 %v829
        %v1019 = vunpack.c.h.b16 %v829
        %v1020 = vunpack.c.l.b16 %v830
        %v1021 = vunpack.c.h.b16 %v830
        %v1022 = vunpack.c.l.b16 %v831
        %v1023 = vunpack.c.h.b16 %v831
        %v1024 = vunpack.c.l.b16 %v832
        %v1025 = vunpack.c.h.b16 %v832
        %v1026 = vunpack.c.l.b16 %v833
        %v1027 = vunpack.c.h.b16 %v833
        %v1028 = vunpack.c.l.b16 %v834
        %v1029 = vunpack.c.h.b16 %v834
        %v1030 = vunpack.c.l.b16 %v835
        %v1031 = vunpack.c.h.b16 %v835
        %v1032 = vunpack.c.l.b16 %v836
        %v1033 = vunpack.c.h.b16 %v836
        %v1034 = vunpack.c.l.b16 %v837
        %v1035 = vunpack.c.h.b16 %v837
        %v1036 = vunpack.c.l.b16 %v838
        %v1037 = vunpack.c.h.b16 %v838
        %v1038 = vunpack.c.l.b16 %v839
        %v1039 = vunpack.c.h.b16 %v839
        %v1040 = vunpack.c.l.b16 %v840
        %v1041 = vunpack.c.h.b16 %v840
        %v1042 = vunpack.c.l.b16 %v841
        %v1043 = vunpack.c.h.b16 %v841
        %v1044 = vunpack.c.l.b16 %v842
        %v1045 = vunpack.c.h.b16 %v842
        %v1046 = vunpack.c.l.b16 %v843
        %v1047 = vunpack.c.h.b16 %v843
        %v1048 = vunpack.c.l.b16 %v844
        %v1049 = vunpack.c.h.b16 %v844
        %v1050 = vunpack.c.l.b16 %v845
        %v1051 = vunpack.c.h.b16 %v845
        %v1052 = vunpack.c.l.b16 %v846
        %v1053 = vunpack.c.h.b16 %v846
        %v1054 = vunpack.c.l.b16 %v847
        %v1055 = vunpack.c.h.b16 %v847
        %v1056 = vunpack.c.l.b16 %v848
        %v1057 = vunpack.c.h.b16 %v848
        %v1058 = vunpack.c.l.b16 %v849
        %v1059 = vunpack.c.h.b16 %v849
        %v1060 = vunpack.c.l.b16 %v850
        %v1061 = vunpack.c.h.b16 %v850
        %v1062 = vunpack.c.l.b16 %v851
        %v1063 = vunpack.c.h.b16 %v851
        %v1064 = vunpack.c.l.b16 %v852
        %v1065 = vunpack.c.h.b16 %v852
        %v1066 = vunpack.c.l.b16 %v853
        %v1067 = vunpack.c.h.b16 %v853
        %v1068 = vunpack.c.l.b16 %v854
        %v1069 = vunpack.c.h.b16 %v854
        %v1070 = vunpack.c.l.b16 %v855
        %v1071 = vunpack.c.h.b16 %v855
        %v1072 = vunpack.c.l.b16 %v856
        %v1073 = vunpack.c.h.b16 %v856
        %v1074 = vunpack.c.l.b16 %v857
        %v1075 = vunpack.c.h.b16 %v857
        %v1076 = vunpack.c.l.b16 %v858
        %v1077 = vunpack.c.h.b16 %v858
        %v1078 = vunpack.c.l.b16 %v859
        %v1079 = vunpack.c.h.b16 %v859
        %v1080 = vunpack.c.l.b16 %v860
        %v1081 = vunpack.c.h.b16 %v860
        %v1082 = vunpack.c.l.b16 %v861
        %v1083 = vunpack.c.h.b16 %v861
        %v1084 = vunpack.c.l.b16 %v862
        %v1085 = vunpack.c.h.b16 %v862
        %v1086 = vunpack.c.l.b16 %v863
        %v1087 = vunpack.c.h.b16 %v863
        %v1088 = vunpack.c.l.b16 %v864
        %v1089 = vunpack.c.h.b16 %v864
        %v1090 = vunpack.c.l.b16 %v865
        %v1091 = vunpack.c.h.b16 %v865
        %v1092 = vunpack.c.l.b16 %v866
        %v1093 = vunpack.c.h.b16 %v866
        %v1094 = vunpack.c.l.b16 %v867
        %v1095 = vunpack.c.h.b16 %v867
        %v1096 = vunpack.c.l.b16 %v868
        %v1097 = vunpack.c.h.b16 %v868
        %v1098 = vunpack.c.l.b16 %v869
        %v1099 = vunpack.c.h.b16 %v869
        %v1100 = vunpack.c.l.b16 %v870
        %v1101 = vunpack.c.h.b16 %v870
        %v1102 = vunpack.c.l.b16 %v871
        %v1103 = vunpack.c.h.b16 %v871
        %v1104 = vunpack.c.l.b16 %v872
        %v1105 = vunpack.c.h.b16 %v872
        %v1106 = vunpack.c.l.b16 %v873
        %v1107 = vunpack.c.h.b16 %v873
        %v1108 = vunpack.c.l.b16 %v874
        %v1109 = vunpack.c.h.b16 %v874
        %v1110 = vunpack.c.l.b16 %v875
        %v1111 = vunpack.c.h.b16 %v875
        %v1112 = vunpack.c.l.b16 %v876
        %v1113 = vunpack.c.h.b16 %v876
        %v1114 = vunpack.c.l.b16 %v877
        %v1115 = vunpack.c.h.b16 %v877
        %v1116 = vunpack.c.l.b16 %v878
        %v1117 = vunpack.c.h.b16 %v878
        %v1118 = vunpack.c.l.b16 %v879
        %v1119 = vunpack.c.h.b16 %v879
        %v1120 = vunpack.c.l.b16 %v880
        %v1121 = vunpack.c.h.b16 %v880
        %v1122 = vlaneseq
        %v1123 = vand.u32 %v1122, 127
        %v1124 = vlaneseq
        %v1125 = vshrl.u32 %v1124, 7
        %v1126 = vsub.s32 %v1123, %v1125
        %v1127 = vrot.slane %v994, %v1126
        %v1128 = vadd.s32 %v1123, 4294967288
        %v1129 = vlaneseq
        %v1130 = vshrl.u32 %v1129, 7
        %v1131 = vsub.s32 %v1128, %v1130
        %v1132 = vrot.slane %v995, %v1131
        %vm1133 = vcmask 130112
        %v1134 = vsel %vm1133, %v1132, %v1127
        %v1135 = vadd.s32 %v1123, 4294967280
        %v1136 = vlaneseq
        %v1137 = vshrl.u32 %v1136, 7
        %v1138 = vsub.s32 %v1135, %v1137
        %v1139 = vrot.slane %v996, %v1138
        %vm1140 = vcmask 195712
        %v1141 = vsel %vm1140, %v1139, %v1134
        %v1142 = vadd.s32 %v1123, 4294967272
        %v1143 = vlaneseq
        %v1144 = vshrl.u32 %v1143, 7
        %v1145 = vsub.s32 %v1142, %v1144
        %v1146 = vrot.slane %v997, %v1145
        %vm1147 = vcmask 261312
        %v1148 = vsel %vm1147, %v1146, %v1141
        %v1149 = vadd.s32 %v1123, 4294967264
        %v1150 = vlaneseq
        %v1151 = vshrl.u32 %v1150, 7
        %v1152 = vsub.s32 %v1149, %v1151
        %v1153 = vrot.slane %v998, %v1152
        %vm1154 = vcmask 326912
        %v1155 = vsel %vm1154, %v1153, %v1148
        %v1156 = vadd.s32 %v1123, 4294967256
        %v1157 = vlaneseq
        %v1158 = vshrl.u32 %v1157, 7
        %v1159 = vsub.s32 %v1156, %v1158
        %v1160 = vrot.slane %v999, %v1159
        %vm1161 = vcmask 392512
        %v1162 = vsel %vm1161, %v1160, %v1155
        %v1163 = vadd.s32 %v1123, 4294967248
        %v1164 = vlaneseq
        %v1165 = vshrl.u32 %v1164, 7
        %v1166 = vsub.s32 %v1163, %v1165
        %v1167 = vrot.slane %v1000, %v1166
        %vm1168 = vcmask 458112
        %v1169 = vsel %vm1168, %v1167, %v1162
        %v1170 = vadd.s32 %v1123, 4294967240
        %v1171 = vlaneseq
        %v1172 = vshrl.u32 %v1171, 7
        %v1173 = vsub.s32 %v1170, %v1172
        %v1174 = vrot.slane %v1001, %v1173
        %vm1175 = vcmask 523712
        %v1176 = vsel %vm1175, %v1174, %v1169
        %v1177 = vadd.s32 %v1123, 4294967232
        %v1178 = vlaneseq
        %v1179 = vshrl.u32 %v1178, 7
        %v1180 = vsub.s32 %v1177, %v1179
        %v1181 = vrot.slane %v1002, %v1180
        %vm1182 = vcmask 589312
        %v1183 = vsel %vm1182, %v1181, %v1176
        %v1184 = vadd.s32 %v1123, 4294967224
        %v1185 = vlaneseq
        %v1186 = vshrl.u32 %v1185, 7
        %v1187 = vsub.s32 %v1184, %v1186
        %v1188 = vrot.slane %v1003, %v1187
        %vm1189 = vcmask 654912
        %v1190 = vsel %vm1189, %v1188, %v1183
        %v1191 = vadd.s32 %v1123, 4294967216
        %v1192 = vlaneseq
        %v1193 = vshrl.u32 %v1192, 7
        %v1194 = vsub.s32 %v1191, %v1193
        %v1195 = vrot.slane %v1004, %v1194
        %vm1196 = vcmask 720512
        %v1197 = vsel %vm1196, %v1195, %v1190
        %v1198 = vadd.s32 %v1123, 4294967208
        %v1199 = vlaneseq
        %v1200 = vshrl.u32 %v1199, 7
        %v1201 = vsub.s32 %v1198, %v1200
        %v1202 = vrot.slane %v1005, %v1201
        %vm1203 = vcmask 786112
        %v1204 = vsel %vm1203, %v1202, %v1197
        %v1205 = vadd.s32 %v1123, 4294967200
        %v1206 = vlaneseq
        %v1207 = vshrl.u32 %v1206, 7
        %v1208 = vsub.s32 %v1205, %v1207
        %v1209 = vrot.slane %v1006, %v1208
        %vm1210 = vcmask 851712
        %v1211 = vsel %vm1210, %v1209, %v1204
        %v1212 = vadd.s32 %v1123, 4294967192
        %v1213 = vlaneseq
        %v1214 = vshrl.u32 %v1213, 7
        %v1215 = vsub.s32 %v1212, %v1214
        %v1216 = vrot.slane %v1007, %v1215
        %vm1217 = vcmask 917312
        %v1218 = vsel %vm1217, %v1216, %v1211
        %v1219 = vadd.s32 %v1123, 4294967184
        %v1220 = vlaneseq
        %v1221 = vshrl.u32 %v1220, 7
        %v1222 = vsub.s32 %v1219, %v1221
        %v1223 = vrot.slane %v1008, %v1222
        %vm1224 = vcmask 982912
        %v1225 = vsel %vm1224, %v1223, %v1218
        %v1226 = vadd.s32 %v1123, 4294967176
        %v1227 = vlaneseq
        %v1228 = vshrl.u32 %v1227, 7
        %v1229 = vsub.s32 %v1226, %v1228
        %v1230 = vrot.slane %v1009, %v1229
        %vm1231 = vcmask 1048512
        %v1232 = vsel %vm1231, %v1230, %v1225
        %v1233 = vlaneseq
        %v1234 = vshrl.u32 %v1233, 7
        %v1235 = vsub.s32 %v1123, %v1234
        %v1236 = vrot.slane %v1010, %v1235
        %v1237 = vlaneseq
        %v1238 = vshrl.u32 %v1237, 7
        %v1239 = vsub.s32 %v1128, %v1238
        %v1240 = vrot.slane %v1011, %v1239
        %v1241 = vsel %vm1133, %v1240, %v1236
        %v1242 = vlaneseq
        %v1243 = vshrl.u32 %v1242, 7
        %v1244 = vsub.s32 %v1135, %v1243
        %v1245 = vrot.slane %v1012, %v1244
        %v1246 = vsel %vm1140, %v1245, %v1241
        %v1247 = vlaneseq
        %v1248 = vshrl.u32 %v1247, 7
        %v1249 = vsub.s32 %v1142, %v1248
        %v1250 = vrot.slane %v1013, %v1249
        %v1251 = vsel %vm1147, %v1250, %v1246
        %v1252 = vlaneseq
        %v1253 = vshrl.u32 %v1252, 7
        %v1254 = vsub.s32 %v1149, %v1253
        %v1255 = vrot.slane %v1014, %v1254
        %v1256 = vsel %vm1154, %v1255, %v1251
        %v1257 = vlaneseq
        %v1258 = vshrl.u32 %v1257, 7
        %v1259 = vsub.s32 %v1156, %v1258
        %v1260 = vrot.slane %v1015, %v1259
        %v1261 = vsel %vm1161, %v1260, %v1256
        %v1262 = vlaneseq
        %v1263 = vshrl.u32 %v1262, 7
        %v1264 = vsub.s32 %v1163, %v1263
        %v1265 = vrot.slane %v1016, %v1264
        %v1266 = vsel %vm1168, %v1265, %v1261
        %v1267 = vlaneseq
        %v1268 = vshrl.u32 %v1267, 7
        %v1269 = vsub.s32 %v1170, %v1268
        %v1270 = vrot.slane %v1017, %v1269
        %v1271 = vsel %vm1175, %v1270, %v1266
        %v1272 = vlaneseq
        %v1273 = vshrl.u32 %v1272, 7
        %v1274 = vsub.s32 %v1177, %v1273
        %v1275 = vrot.slane %v1018, %v1274
        %v1276 = vsel %vm1182, %v1275, %v1271
        %v1277 = vlaneseq
        %v1278 = vshrl.u32 %v1277, 7
        %v1279 = vsub.s32 %v1184, %v1278
        %v1280 = vrot.slane %v1019, %v1279
        %v1281 = vsel %vm1189, %v1280, %v1276
        %v1282 = vlaneseq
        %v1283 = vshrl.u32 %v1282, 7
        %v1284 = vsub.s32 %v1191, %v1283
        %v1285 = vrot.slane %v1020, %v1284
        %v1286 = vsel %vm1196, %v1285, %v1281
        %v1287 = vlaneseq
        %v1288 = vshrl.u32 %v1287, 7
        %v1289 = vsub.s32 %v1198, %v1288
        %v1290 = vrot.slane %v1021, %v1289
        %v1291 = vsel %vm1203, %v1290, %v1286
        %v1292 = vlaneseq
        %v1293 = vshrl.u32 %v1292, 7
        %v1294 = vsub.s32 %v1205, %v1293
        %v1295 = vrot.slane %v1022, %v1294
        %v1296 = vsel %vm1210, %v1295, %v1291
        %v1297 = vlaneseq
        %v1298 = vshrl.u32 %v1297, 7
        %v1299 = vsub.s32 %v1212, %v1298
        %v1300 = vrot.slane %v1023, %v1299
        %v1301 = vsel %vm1217, %v1300, %v1296
        %v1302 = vlaneseq
        %v1303 = vshrl.u32 %v1302, 7
        %v1304 = vsub.s32 %v1219, %v1303
        %v1305 = vrot.slane %v1024, %v1304
        %v1306 = vsel %vm1224, %v1305, %v1301
        %v1307 = vlaneseq
        %v1308 = vshrl.u32 %v1307, 7
        %v1309 = vsub.s32 %v1226, %v1308
        %v1310 = vrot.slane %v1025, %v1309
        %v1311 = vsel %vm1231, %v1310, %v1306
        %v1312 = vlaneseq
        %v1313 = vshrl.u32 %v1312, 7
        %v1314 = vsub.s32 %v1123, %v1313
        %v1315 = vrot.slane %v1026, %v1314
        %v1316 = vlaneseq
        %v1317 = vshrl.u32 %v1316, 7
        %v1318 = vsub.s32 %v1128, %v1317
        %v1319 = vrot.slane %v1027, %v1318
        %v1320 = vsel %vm1133, %v1319, %v1315
        %v1321 = vlaneseq
        %v1322 = vshrl.u32 %v1321, 7
        %v1323 = vsub.s32 %v1135, %v1322
        %v1324 = vrot.slane %v1028, %v1323
        %v1325 = vsel %vm1140, %v1324, %v1320
        %v1326 = vlaneseq
        %v1327 = vshrl.u32 %v1326, 7
        %v1328 = vsub.s32 %v1142, %v1327
        %v1329 = vrot.slane %v1029, %v1328
        %v1330 = vsel %vm1147, %v1329, %v1325
        %v1331 = vlaneseq
        %v1332 = vshrl.u32 %v1331, 7
        %v1333 = vsub.s32 %v1149, %v1332
        %v1334 = vrot.slane %v1030, %v1333
        %v1335 = vsel %vm1154, %v1334, %v1330
        %v1336 = vlaneseq
        %v1337 = vshrl.u32 %v1336, 7
        %v1338 = vsub.s32 %v1156, %v1337
        %v1339 = vrot.slane %v1031, %v1338
        %v1340 = vsel %vm1161, %v1339, %v1335
        %v1341 = vlaneseq
        %v1342 = vshrl.u32 %v1341, 7
        %v1343 = vsub.s32 %v1163, %v1342
        %v1344 = vrot.slane %v1032, %v1343
        %v1345 = vsel %vm1168, %v1344, %v1340
        %v1346 = vlaneseq
        %v1347 = vshrl.u32 %v1346, 7
        %v1348 = vsub.s32 %v1170, %v1347
        %v1349 = vrot.slane %v1033, %v1348
        %v1350 = vsel %vm1175, %v1349, %v1345
        %v1351 = vlaneseq
        %v1352 = vshrl.u32 %v1351, 7
        %v1353 = vsub.s32 %v1177, %v1352
        %v1354 = vrot.slane %v1034, %v1353
        %v1355 = vsel %vm1182, %v1354, %v1350
        %v1356 = vlaneseq
        %v1357 = vshrl.u32 %v1356, 7
        %v1358 = vsub.s32 %v1184, %v1357
        %v1359 = vrot.slane %v1035, %v1358
        %v1360 = vsel %vm1189, %v1359, %v1355
        %v1361 = vlaneseq
        %v1362 = vshrl.u32 %v1361, 7
        %v1363 = vsub.s32 %v1191, %v1362
        %v1364 = vrot.slane %v1036, %v1363
        %v1365 = vsel %vm1196, %v1364, %v1360
        %v1366 = vlaneseq
        %v1367 = vshrl.u32 %v1366, 7
        %v1368 = vsub.s32 %v1198, %v1367
        %v1369 = vrot.slane %v1037, %v1368
        %v1370 = vsel %vm1203, %v1369, %v1365
        %v1371 = vlaneseq
        %v1372 = vshrl.u32 %v1371, 7
        %v1373 = vsub.s32 %v1205, %v1372
        %v1374 = vrot.slane %v1038, %v1373
        %v1375 = vsel %vm1210, %v1374, %v1370
        %v1376 = vlaneseq
        %v1377 = vshrl.u32 %v1376, 7
        %v1378 = vsub.s32 %v1212, %v1377
        %v1379 = vrot.slane %v1039, %v1378
        %v1380 = vsel %vm1217, %v1379, %v1375
        %v1381 = vlaneseq
        %v1382 = vshrl.u32 %v1381, 7
        %v1383 = vsub.s32 %v1219, %v1382
        %v1384 = vrot.slane %v1040, %v1383
        %v1385 = vsel %vm1224, %v1384, %v1380
        %v1386 = vlaneseq
        %v1387 = vshrl.u32 %v1386, 7
        %v1388 = vsub.s32 %v1226, %v1387
        %v1389 = vrot.slane %v1041, %v1388
        %v1390 = vsel %vm1231, %v1389, %v1385
        %v1391 = vlaneseq
        %v1392 = vshrl.u32 %v1391, 7
        %v1393 = vsub.s32 %v1123, %v1392
        %v1394 = vrot.slane %v1042, %v1393
        %v1395 = vlaneseq
        %v1396 = vshrl.u32 %v1395, 7
        %v1397 = vsub.s32 %v1128, %v1396
        %v1398 = vrot.slane %v1043, %v1397
        %v1399 = vsel %vm1133, %v1398, %v1394
        %v1400 = vlaneseq
        %v1401 = vshrl.u32 %v1400, 7
        %v1402 = vsub.s32 %v1135, %v1401
        %v1403 = vrot.slane %v1044, %v1402
        %v1404 = vsel %vm1140, %v1403, %v1399
        %v1405 = vlaneseq
        %v1406 = vshrl.u32 %v1405, 7
        %v1407 = vsub.s32 %v1142, %v1406
        %v1408 = vrot.slane %v1045, %v1407
        %v1409 = vsel %vm1147, %v1408, %v1404
        %v1410 = vlaneseq
        %v1411 = vshrl.u32 %v1410, 7
        %v1412 = vsub.s32 %v1149, %v1411
        %v1413 = vrot.slane %v1046, %v1412
        %v1414 = vsel %vm1154, %v1413, %v1409
        %v1415 = vlaneseq
        %v1416 = vshrl.u32 %v1415, 7
        %v1417 = vsub.s32 %v1156, %v1416
        %v1418 = vrot.slane %v1047, %v1417
        %v1419 = vsel %vm1161, %v1418, %v1414
        %v1420 = vlaneseq
        %v1421 = vshrl.u32 %v1420, 7
        %v1422 = vsub.s32 %v1163, %v1421
        %v1423 = vrot.slane %v1048, %v1422
        %v1424 = vsel %vm1168, %v1423, %v1419
        %v1425 = vlaneseq
        %v1426 = vshrl.u32 %v1425, 7
        %v1427 = vsub.s32 %v1170, %v1426
        %v1428 = vrot.slane %v1049, %v1427
        %v1429 = vsel %vm1175, %v1428, %v1424
        %v1430 = vlaneseq
        %v1431 = vshrl.u32 %v1430, 7
        %v1432 = vsub.s32 %v1177, %v1431
        %v1433 = vrot.slane %v1050, %v1432
        %v1434 = vsel %vm1182, %v1433, %v1429
        %v1435 = vlaneseq
        %v1436 = vshrl.u32 %v1435, 7
        %v1437 = vsub.s32 %v1184, %v1436
        %v1438 = vrot.slane %v1051, %v1437
        %v1439 = vsel %vm1189, %v1438, %v1434
        %v1440 = vlaneseq
        %v1441 = vshrl.u32 %v1440, 7
        %v1442 = vsub.s32 %v1191, %v1441
        %v1443 = vrot.slane %v1052, %v1442
        %v1444 = vsel %vm1196, %v1443, %v1439
        %v1445 = vlaneseq
        %v1446 = vshrl.u32 %v1445, 7
        %v1447 = vsub.s32 %v1198, %v1446
        %v1448 = vrot.slane %v1053, %v1447
        %v1449 = vsel %vm1203, %v1448, %v1444
        %v1450 = vlaneseq
        %v1451 = vshrl.u32 %v1450, 7
        %v1452 = vsub.s32 %v1205, %v1451
        %v1453 = vrot.slane %v1054, %v1452
        %v1454 = vsel %vm1210, %v1453, %v1449
        %v1455 = vlaneseq
        %v1456 = vshrl.u32 %v1455, 7
        %v1457 = vsub.s32 %v1212, %v1456
        %v1458 = vrot.slane %v1055, %v1457
        %v1459 = vsel %vm1217, %v1458, %v1454
        %v1460 = vlaneseq
        %v1461 = vshrl.u32 %v1460, 7
        %v1462 = vsub.s32 %v1219, %v1461
        %v1463 = vrot.slane %v1056, %v1462
        %v1464 = vsel %vm1224, %v1463, %v1459
        %v1465 = vlaneseq
        %v1466 = vshrl.u32 %v1465, 7
        %v1467 = vsub.s32 %v1226, %v1466
        %v1468 = vrot.slane %v1057, %v1467
        %v1469 = vsel %vm1231, %v1468, %v1464
        %v1470 = vlaneseq
        %v1471 = vshrl.u32 %v1470, 7
        %v1472 = vsub.s32 %v1123, %v1471
        %v1473 = vrot.slane %v1058, %v1472
        %v1474 = vlaneseq
        %v1475 = vshrl.u32 %v1474, 7
        %v1476 = vsub.s32 %v1128, %v1475
        %v1477 = vrot.slane %v1059, %v1476
        %v1478 = vsel %vm1133, %v1477, %v1473
        %v1479 = vlaneseq
        %v1480 = vshrl.u32 %v1479, 7
        %v1481 = vsub.s32 %v1135, %v1480
        %v1482 = vrot.slane %v1060, %v1481
        %v1483 = vsel %vm1140, %v1482, %v1478
        %v1484 = vlaneseq
        %v1485 = vshrl.u32 %v1484, 7
        %v1486 = vsub.s32 %v1142, %v1485
        %v1487 = vrot.slane %v1061, %v1486
        %v1488 = vsel %vm1147, %v1487, %v1483
        %v1489 = vlaneseq
        %v1490 = vshrl.u32 %v1489, 7
        %v1491 = vsub.s32 %v1149, %v1490
        %v1492 = vrot.slane %v1062, %v1491
        %v1493 = vsel %vm1154, %v1492, %v1488
        %v1494 = vlaneseq
        %v1495 = vshrl.u32 %v1494, 7
        %v1496 = vsub.s32 %v1156, %v1495
        %v1497 = vrot.slane %v1063, %v1496
        %v1498 = vsel %vm1161, %v1497, %v1493
        %v1499 = vlaneseq
        %v1500 = vshrl.u32 %v1499, 7
        %v1501 = vsub.s32 %v1163, %v1500
        %v1502 = vrot.slane %v1064, %v1501
        %v1503 = vsel %vm1168, %v1502, %v1498
        %v1504 = vlaneseq
        %v1505 = vshrl.u32 %v1504, 7
        %v1506 = vsub.s32 %v1170, %v1505
        %v1507 = vrot.slane %v1065, %v1506
        %v1508 = vsel %vm1175, %v1507, %v1503
        %v1509 = vlaneseq
        %v1510 = vshrl.u32 %v1509, 7
        %v1511 = vsub.s32 %v1177, %v1510
        %v1512 = vrot.slane %v1066, %v1511
        %v1513 = vsel %vm1182, %v1512, %v1508
        %v1514 = vlaneseq
        %v1515 = vshrl.u32 %v1514, 7
        %v1516 = vsub.s32 %v1184, %v1515
        %v1517 = vrot.slane %v1067, %v1516
        %v1518 = vsel %vm1189, %v1517, %v1513
        %v1519 = vlaneseq
        %v1520 = vshrl.u32 %v1519, 7
        %v1521 = vsub.s32 %v1191, %v1520
        %v1522 = vrot.slane %v1068, %v1521
        %v1523 = vsel %vm1196, %v1522, %v1518
        %v1524 = vlaneseq
        %v1525 = vshrl.u32 %v1524, 7
        %v1526 = vsub.s32 %v1198, %v1525
        %v1527 = vrot.slane %v1069, %v1526
        %v1528 = vsel %vm1203, %v1527, %v1523
        %v1529 = vlaneseq
        %v1530 = vshrl.u32 %v1529, 7
        %v1531 = vsub.s32 %v1205, %v1530
        %v1532 = vrot.slane %v1070, %v1531
        %v1533 = vsel %vm1210, %v1532, %v1528
        %v1534 = vlaneseq
        %v1535 = vshrl.u32 %v1534, 7
        %v1536 = vsub.s32 %v1212, %v1535
        %v1537 = vrot.slane %v1071, %v1536
        %v1538 = vsel %vm1217, %v1537, %v1533
        %v1539 = vlaneseq
        %v1540 = vshrl.u32 %v1539, 7
        %v1541 = vsub.s32 %v1219, %v1540
        %v1542 = vrot.slane %v1072, %v1541
        %v1543 = vsel %vm1224, %v1542, %v1538
        %v1544 = vlaneseq
        %v1545 = vshrl.u32 %v1544, 7
        %v1546 = vsub.s32 %v1226, %v1545
        %v1547 = vrot.slane %v1073, %v1546
        %v1548 = vsel %vm1231, %v1547, %v1543
        %v1549 = vlaneseq
        %v1550 = vshrl.u32 %v1549, 7
        %v1551 = vsub.s32 %v1123, %v1550
        %v1552 = vrot.slane %v1074, %v1551
        %v1553 = vlaneseq
        %v1554 = vshrl.u32 %v1553, 7
        %v1555 = vsub.s32 %v1128, %v1554
        %v1556 = vrot.slane %v1075, %v1555
        %v1557 = vsel %vm1133, %v1556, %v1552
        %v1558 = vlaneseq
        %v1559 = vshrl.u32 %v1558, 7
        %v1560 = vsub.s32 %v1135, %v1559
        %v1561 = vrot.slane %v1076, %v1560
        %v1562 = vsel %vm1140, %v1561, %v1557
        %v1563 = vlaneseq
        %v1564 = vshrl.u32 %v1563, 7
        %v1565 = vsub.s32 %v1142, %v1564
        %v1566 = vrot.slane %v1077, %v1565
        %v1567 = vsel %vm1147, %v1566, %v1562
        %v1568 = vlaneseq
        %v1569 = vshrl.u32 %v1568, 7
        %v1570 = vsub.s32 %v1149, %v1569
        %v1571 = vrot.slane %v1078, %v1570
        %v1572 = vsel %vm1154, %v1571, %v1567
        %v1573 = vlaneseq
        %v1574 = vshrl.u32 %v1573, 7
        %v1575 = vsub.s32 %v1156, %v1574
        %v1576 = vrot.slane %v1079, %v1575
        %v1577 = vsel %vm1161, %v1576, %v1572
        %v1578 = vlaneseq
        %v1579 = vshrl.u32 %v1578, 7
        %v1580 = vsub.s32 %v1163, %v1579
        %v1581 = vrot.slane %v1080, %v1580
        %v1582 = vsel %vm1168, %v1581, %v1577
        %v1583 = vlaneseq
        %v1584 = vshrl.u32 %v1583, 7
        %v1585 = vsub.s32 %v1170, %v1584
        %v1586 = vrot.slane %v1081, %v1585
        %v1587 = vsel %vm1175, %v1586, %v1582
        %v1588 = vlaneseq
        %v1589 = vshrl.u32 %v1588, 7
        %v1590 = vsub.s32 %v1177, %v1589
        %v1591 = vrot.slane %v1082, %v1590
        %v1592 = vsel %vm1182, %v1591, %v1587
        %v1593 = vlaneseq
        %v1594 = vshrl.u32 %v1593, 7
        %v1595 = vsub.s32 %v1184, %v1594
        %v1596 = vrot.slane %v1083, %v1595
        %v1597 = vsel %vm1189, %v1596, %v1592
        %v1598 = vlaneseq
        %v1599 = vshrl.u32 %v1598, 7
        %v1600 = vsub.s32 %v1191, %v1599
        %v1601 = vrot.slane %v1084, %v1600
        %v1602 = vsel %vm1196, %v1601, %v1597
        %v1603 = vlaneseq
        %v1604 = vshrl.u32 %v1603, 7
        %v1605 = vsub.s32 %v1198, %v1604
        %v1606 = vrot.slane %v1085, %v1605
        %v1607 = vsel %vm1203, %v1606, %v1602
        %v1608 = vlaneseq
        %v1609 = vshrl.u32 %v1608, 7
        %v1610 = vsub.s32 %v1205, %v1609
        %v1611 = vrot.slane %v1086, %v1610
        %v1612 = vsel %vm1210, %v1611, %v1607
        %v1613 = vlaneseq
        %v1614 = vshrl.u32 %v1613, 7
        %v1615 = vsub.s32 %v1212, %v1614
        %v1616 = vrot.slane %v1087, %v1615
        %v1617 = vsel %vm1217, %v1616, %v1612
        %v1618 = vlaneseq
        %v1619 = vshrl.u32 %v1618, 7
        %v1620 = vsub.s32 %v1219, %v1619
        %v1621 = vrot.slane %v1088, %v1620
        %v1622 = vsel %vm1224, %v1621, %v1617
        %v1623 = vlaneseq
        %v1624 = vshrl.u32 %v1623, 7
        %v1625 = vsub.s32 %v1226, %v1624
        %v1626 = vrot.slane %v1089, %v1625
        %v1627 = vsel %vm1231, %v1626, %v1622
        %v1628 = vlaneseq
        %v1629 = vshrl.u32 %v1628, 7
        %v1630 = vsub.s32 %v1123, %v1629
        %v1631 = vrot.slane %v1090, %v1630
        %v1632 = vlaneseq
        %v1633 = vshrl.u32 %v1632, 7
        %v1634 = vsub.s32 %v1128, %v1633
        %v1635 = vrot.slane %v1091, %v1634
        %v1636 = vsel %vm1133, %v1635, %v1631
        %v1637 = vlaneseq
        %v1638 = vshrl.u32 %v1637, 7
        %v1639 = vsub.s32 %v1135, %v1638
        %v1640 = vrot.slane %v1092, %v1639
        %v1641 = vsel %vm1140, %v1640, %v1636
        %v1642 = vlaneseq
        %v1643 = vshrl.u32 %v1642, 7
        %v1644 = vsub.s32 %v1142, %v1643
        %v1645 = vrot.slane %v1093, %v1644
        %v1646 = vsel %vm1147, %v1645, %v1641
        %v1647 = vlaneseq
        %v1648 = vshrl.u32 %v1647, 7
        %v1649 = vsub.s32 %v1149, %v1648
        %v1650 = vrot.slane %v1094, %v1649
        %v1651 = vsel %vm1154, %v1650, %v1646
        %v1652 = vlaneseq
        %v1653 = vshrl.u32 %v1652, 7
        %v1654 = vsub.s32 %v1156, %v1653
        %v1655 = vrot.slane %v1095, %v1654
        %v1656 = vsel %vm1161, %v1655, %v1651
        %v1657 = vlaneseq
        %v1658 = vshrl.u32 %v1657, 7
        %v1659 = vsub.s32 %v1163, %v1658
        %v1660 = vrot.slane %v1096, %v1659
        %v1661 = vsel %vm1168, %v1660, %v1656
        %v1662 = vlaneseq
        %v1663 = vshrl.u32 %v1662, 7
        %v1664 = vsub.s32 %v1170, %v1663
        %v1665 = vrot.slane %v1097, %v1664
        %v1666 = vsel %vm1175, %v1665, %v1661
        %v1667 = vlaneseq
        %v1668 = vshrl.u32 %v1667, 7
        %v1669 = vsub.s32 %v1177, %v1668
        %v1670 = vrot.slane %v1098, %v1669
        %v1671 = vsel %vm1182, %v1670, %v1666
        %v1672 = vlaneseq
        %v1673 = vshrl.u32 %v1672, 7
        %v1674 = vsub.s32 %v1184, %v1673
        %v1675 = vrot.slane %v1099, %v1674
        %v1676 = vsel %vm1189, %v1675, %v1671
        %v1677 = vlaneseq
        %v1678 = vshrl.u32 %v1677, 7
        %v1679 = vsub.s32 %v1191, %v1678
        %v1680 = vrot.slane %v1100, %v1679
        %v1681 = vsel %vm1196, %v1680, %v1676
        %v1682 = vlaneseq
        %v1683 = vshrl.u32 %v1682, 7
        %v1684 = vsub.s32 %v1198, %v1683
        %v1685 = vrot.slane %v1101, %v1684
        %v1686 = vsel %vm1203, %v1685, %v1681
        %v1687 = vlaneseq
        %v1688 = vshrl.u32 %v1687, 7
        %v1689 = vsub.s32 %v1205, %v1688
        %v1690 = vrot.slane %v1102, %v1689
        %v1691 = vsel %vm1210, %v1690, %v1686
        %v1692 = vlaneseq
        %v1693 = vshrl.u32 %v1692, 7
        %v1694 = vsub.s32 %v1212, %v1693
        %v1695 = vrot.slane %v1103, %v1694
        %v1696 = vsel %vm1217, %v1695, %v1691
        %v1697 = vlaneseq
        %v1698 = vshrl.u32 %v1697, 7
        %v1699 = vsub.s32 %v1219, %v1698
        %v1700 = vrot.slane %v1104, %v1699
        %v1701 = vsel %vm1224, %v1700, %v1696
        %v1702 = vlaneseq
        %v1703 = vshrl.u32 %v1702, 7
        %v1704 = vsub.s32 %v1226, %v1703
        %v1705 = vrot.slane %v1105, %v1704
        %v1706 = vsel %vm1231, %v1705, %v1701
        %v1707 = vlaneseq
        %v1708 = vshrl.u32 %v1707, 7
        %v1709 = vsub.s32 %v1123, %v1708
        %v1710 = vrot.slane %v1106, %v1709
        %v1711 = vlaneseq
        %v1712 = vshrl.u32 %v1711, 7
        %v1713 = vsub.s32 %v1128, %v1712
        %v1714 = vrot.slane %v1107, %v1713
        %v1715 = vsel %vm1133, %v1714, %v1710
        %v1716 = vlaneseq
        %v1717 = vshrl.u32 %v1716, 7
        %v1718 = vsub.s32 %v1135, %v1717
        %v1719 = vrot.slane %v1108, %v1718
        %v1720 = vsel %vm1140, %v1719, %v1715
        %v1721 = vlaneseq
        %v1722 = vshrl.u32 %v1721, 7
        %v1723 = vsub.s32 %v1142, %v1722
        %v1724 = vrot.slane %v1109, %v1723
        %v1725 = vsel %vm1147, %v1724, %v1720
        %v1726 = vlaneseq
        %v1727 = vshrl.u32 %v1726, 7
        %v1728 = vsub.s32 %v1149, %v1727
        %v1729 = vrot.slane %v1110, %v1728
        %v1730 = vsel %vm1154, %v1729, %v1725
        %v1731 = vlaneseq
        %v1732 = vshrl.u32 %v1731, 7
        %v1733 = vsub.s32 %v1156, %v1732
        %v1734 = vrot.slane %v1111, %v1733
        %v1735 = vsel %vm1161, %v1734, %v1730
        %v1736 = vlaneseq
        %v1737 = vshrl.u32 %v1736, 7
        %v1738 = vsub.s32 %v1163, %v1737
        %v1739 = vrot.slane %v1112, %v1738
        %v1740 = vsel %vm1168, %v1739, %v1735
        %v1741 = vlaneseq
        %v1742 = vshrl.u32 %v1741, 7
        %v1743 = vsub.s32 %v1170, %v1742
        %v1744 = vrot.slane %v1113, %v1743
        %v1745 = vsel %vm1175, %v1744, %v1740
        %v1746 = vlaneseq
        %v1747 = vshrl.u32 %v1746, 7
        %v1748 = vsub.s32 %v1177, %v1747
        %v1749 = vrot.slane %v1114, %v1748
        %v1750 = vsel %vm1182, %v1749, %v1745
        %v1751 = vlaneseq
        %v1752 = vshrl.u32 %v1751, 7
        %v1753 = vsub.s32 %v1184, %v1752
        %v1754 = vrot.slane %v1115, %v1753
        %v1755 = vsel %vm1189, %v1754, %v1750
        %v1756 = vlaneseq
        %v1757 = vshrl.u32 %v1756, 7
        %v1758 = vsub.s32 %v1191, %v1757
        %v1759 = vrot.slane %v1116, %v1758
        %v1760 = vsel %vm1196, %v1759, %v1755
        %v1761 = vlaneseq
        %v1762 = vshrl.u32 %v1761, 7
        %v1763 = vsub.s32 %v1198, %v1762
        %v1764 = vrot.slane %v1117, %v1763
        %v1765 = vsel %vm1203, %v1764, %v1760
        %v1766 = vlaneseq
        %v1767 = vshrl.u32 %v1766, 7
        %v1768 = vsub.s32 %v1205, %v1767
        %v1769 = vrot.slane %v1118, %v1768
        %v1770 = vsel %vm1210, %v1769, %v1765
        %v1771 = vlaneseq
        %v1772 = vshrl.u32 %v1771, 7
        %v1773 = vsub.s32 %v1212, %v1772
        %v1774 = vrot.slane %v1119, %v1773
        %v1775 = vsel %vm1217, %v1774, %v1770
        %v1776 = vlaneseq
        %v1777 = vshrl.u32 %v1776, 7
        %v1778 = vsub.s32 %v1219, %v1777
        %v1779 = vrot.slane %v1120, %v1778
        %v1780 = vsel %vm1224, %v1779, %v1775
        %v1781 = vlaneseq
        %v1782 = vshrl.u32 %v1781, 7
        %v1783 = vsub.s32 %v1226, %v1782
        %v1784 = vrot.slane %v1121, %v1783
        %v1785 = vsel %vm1231, %v1784, %v1780
        %vm1786 = vcmask 1041409
        %v1787 = vsel %vm1786, %v1311, %v1232
        %vm1788 = vcmask 1042434
        %v1789 = vsel %vm1788, %v1390, %v1787
        %vm1790 = vcmask 1043459
        %v1791 = vsel %vm1790, %v1469, %v1789
        %vm1792 = vcmask 1044484
        %v1793 = vsel %vm1792, %v1548, %v1791
        %vm1794 = vcmask 1045509
        %v1795 = vsel %vm1794, %v1627, %v1793
        %vm1796 = vcmask 1046534
        %v1797 = vsel %vm1796, %v1706, %v1795
        %vm1798 = vcmask 1047559
        %v1799 = vsel %vm1798, %v1785, %v1797
        %v1800 = vpack.c.b16 %v1799, %v1799
        %v1834 = vunpack.c.l.b16 %v881
        %v1835 = vunpack.c.h.b16 %v881
        %v1836 = vunpack.c.l.b16 %v882
        %v1837 = vunpack.c.l.b16 %v883
        %v1838 = vunpack.c.h.b16 %v883
        %v1839 = vunpack.c.l.b16 %v884
        %v1840 = vunpack.c.l.b16 %v885
        %v1841 = vunpack.c.h.b16 %v885
        %v1842 = vunpack.c.l.b16 %v886
        %v1843 = vunpack.c.l.b16 %v887
        %v1844 = vunpack.c.h.b16 %v887
        %v1845 = vunpack.c.l.b16 %v888
        %v1846 = vunpack.c.l.b16 %v889
        %v1847 = vunpack.c.h.b16 %v889
        %v1848 = vunpack.c.l.b16 %v890
        %v1849 = vunpack.c.l.b16 %v891
        %v1850 = vunpack.c.h.b16 %v891
        %v1851 = vunpack.c.l.b16 %v892
        %v1852 = vunpack.c.l.b16 %v893
        %v1853 = vunpack.c.h.b16 %v893
        %v1854 = vunpack.c.l.b16 %v894
        %v1855 = vunpack.c.l.b16 %v895
        %v1856 = vunpack.c.h.b16 %v895
        %v1857 = vunpack.c.l.b16 %v896
        %v1858 = vunpack.c.l.b16 %v897
        %v1859 = vunpack.c.h.b16 %v897
        %v1860 = vunpack.c.l.b16 %v898
        %v1861 = vunpack.c.l.b16 %v899
        %v1862 = vunpack.c.h.b16 %v899
        %v1863 = vunpack.c.l.b16 %v900
        %v1864 = vunpack.c.l.b16 %v901
        %v1865 = vunpack.c.h.b16 %v901
        %v1866 = vunpack.c.l.b16 %v902
        %v1867 = vunpack.c.l.b16 %v903
        %v1868 = vunpack.c.h.b16 %v903
        %v1869 = vunpack.c.l.b16 %v904
        %v1870 = vunpack.c.l.b16 %v905
        %v1871 = vunpack.c.h.b16 %v905
        %v1872 = vunpack.c.l.b16 %v906
        %v1873 = vunpack.c.l.b16 %v907
        %v1874 = vunpack.c.h.b16 %v907
        %v1875 = vunpack.c.l.b16 %v908
        %v1876 = vunpack.c.l.b16 %v909
        %v1877 = vunpack.c.h.b16 %v909
        %v1878 = vunpack.c.l.b16 %v910
        %v1879 = vunpack.c.l.b16 %v911
        %v1880 = vunpack.c.h.b16 %v911
        %v1881 = vunpack.c.l.b16 %v912
        %v1882 = vpack.c.b16 %v1837, %v1834
        %v1883 = vpack.c.b16 %v1838, %v1835
        %v1884 = vpack.c.b16 %v1839, %v1836
        %v1885 = vpack.c.b16 %v1843, %v1840
        %v1886 = vpack.c.b16 %v1844, %v1841
        %v1887 = vpack.c.b16 %v1845, %v1842
        %v1888 = vpack.c.b16 %v1849, %v1846
        %v1889 = vpack.c.b16 %v1850, %v1847
        %v1890 = vpack.c.b16 %v1851, %v1848
        %v1891 = vpack.c.b16 %v1855, %v1852
        %v1892 = vpack.c.b16 %v1856, %v1853
        %v1893 = vpack.c.b16 %v1857, %v1854
        %v1894 = vpack.c.b16 %v1861, %v1858
        %v1895 = vpack.c.b16 %v1862, %v1859
        %v1896 = vpack.c.b16 %v1863, %v1860
        %v1897 = vpack.c.b16 %v1867, %v1864
        %v1898 = vpack.c.b16 %v1868, %v1865
        %v1899 = vpack.c.b16 %v1869, %v1866
        %v1900 = vpack.c.b16 %v1873, %v1870
        %v1901 = vpack.c.b16 %v1874, %v1871
        %v1902 = vpack.c.b16 %v1875, %v1872
        %v1903 = vpack.c.b16 %v1879, %v1876
        %v1904 = vpack.c.b16 %v1880, %v1877
        %v1905 = vpack.c.b16 %v1881, %v1878
        %1930 = vmatprep.subr.bf16.mxu0 %v1883
        %1931 = vmatpush1.bf16.msra.mxu0 %v1882
        %1932 = vmatprep.subr.bf16.mxu0 %v1886
        %1933 = vmatpush1.bf16.msra.mxu0 %v1885
        %1934 = vmatprep.subr.bf16.mxu0 %v1889
        %1935 = vmatpush1.bf16.msra.mxu0 %v1888
        %1936 = vmatprep.subr.bf16.mxu0 %v1892
        %1937 = vmatpush1.bf16.msra.mxu0 %v1891
        %1938 = vmatprep.subr.bf16.mxu0 %v1895
        %1939 = vmatpush1.bf16.msra.mxu0 %v1894
        %1940 = vmatprep.subr.bf16.mxu0 %v1898
        %1941 = vmatpush1.bf16.msra.mxu0 %v1897
        %1942 = vmatprep.subr.bf16.mxu0 %v1901
        %1943 = vmatpush1.bf16.msra.mxu0 %v1900
        %1944 = vmatprep.subr.bf16.mxu0 %v1904
        %1945 = vmatpush1.bf16.msra.mxu0 %v1903
        %1946 = vmatprep.subr.bf16.mxu0 0
        %1947 = vmatpush1.bf16.msra.mxu0 0
        %1948 = vmatprep.subr.bf16.mxu0 0
        %1949 = vmatpush1.bf16.msra.mxu0 0
        %1950 = vmatprep.subr.bf16.mxu0 0
        %1951 = vmatpush1.bf16.msra.mxu0 0
        %1952 = vmatprep.subr.bf16.mxu0 0
        %1953 = vmatpush1.bf16.msra.mxu0 0
        %1954 = vmatprep.subr.bf16.mxu0 0
        %1955 = vmatpush1.bf16.msra.mxu0 0
        %1956 = vmatprep.subr.bf16.mxu0 0
        %1957 = vmatpush1.bf16.msra.mxu0 0
        %1958 = vmatprep.subr.bf16.mxu0 0
        %1959 = vmatpush1.bf16.msra.mxu0 0
        %1960 = vmatprep.subr.bf16.mxu0 0
        %1961 = vmatpush1.bf16.msra.mxu0 0
        %1962 = vmatprep.mubr.bf16.mxu0 0
        %1963 = vmatmul.mubr.bf16.gmra.mrb[0].mxu0 %v1800
        %v1964 = vpop.f32.mrb[0].mxu0
        %v1965 = vadd.f32 %v918, %v1964
        %v1966 = vpop.f32.mrb[0].mxu0
        %v1967 = vadd.f32 %v922, %v1966
        %v1968 = vpop.f32.mrb[0].mxu0
        %v1969 = vpop.f32.mrb[0].mxu0
        %1970 = vdwg.mxu0
        %1971 = vmatprep.subr.bf16.mxu0 0
        %1972 = vmatpush1.bf16.msra.mxu0 %v1884
        %1973 = vmatprep.subr.bf16.mxu0 0
        %1974 = vmatpush1.bf16.msra.mxu0 %v1887
        %1975 = vmatprep.subr.bf16.mxu0 0
        %1976 = vmatpush1.bf16.msra.mxu0 %v1890
        %1977 = vmatprep.subr.bf16.mxu0 0
        %1978 = vmatpush1.bf16.msra.mxu0 %v1893
        %1979 = vmatprep.subr.bf16.mxu0 0
        %1980 = vmatpush1.bf16.msra.mxu0 %v1896
        %1981 = vmatprep.subr.bf16.mxu0 0
        %1982 = vmatpush1.bf16.msra.mxu0 %v1899
        %1983 = vmatprep.subr.bf16.mxu0 0
        %1984 = vmatpush1.bf16.msra.mxu0 %v1902
        %1985 = vmatprep.subr.bf16.mxu0 0
        %1986 = vmatpush1.bf16.msra.mxu0 %v1905
        %1987 = vmatprep.subr.bf16.mxu0 0
        %1988 = vmatpush1.bf16.msra.mxu0 0
        %1989 = vmatprep.subr.bf16.mxu0 0
        %1990 = vmatpush1.bf16.msra.mxu0 0
        %1991 = vmatprep.subr.bf16.mxu0 0
        %1992 = vmatpush1.bf16.msra.mxu0 0
        %1993 = vmatprep.subr.bf16.mxu0 0
        %1994 = vmatpush1.bf16.msra.mxu0 0
        %1995 = vmatprep.subr.bf16.mxu0 0
        %1996 = vmatpush1.bf16.msra.mxu0 0
        %1997 = vmatprep.subr.bf16.mxu0 0
        %1998 = vmatpush1.bf16.msra.mxu0 0
        %1999 = vmatprep.subr.bf16.mxu0 0
        %2000 = vmatpush1.bf16.msra.mxu0 0
        %2001 = vmatprep.subr.bf16.mxu0 0
        %2002 = vmatpush1.bf16.msra.mxu0 0
        %2003 = vmatprep.mubr.bf16.mxu0 0
        %2004 = vmatmul.mubr.bf16.gmra.mrb[0].mxu0 %v1800
        %v2005 = vpop.f32.mrb[0].mxu0
        %v2006 = vadd.f32 %v926, %v2005
        %v2007 = vpop.f32.mrb[0].mxu0
        %v2008 = vpop.f32.mrb[0].mxu0
        %v2009 = vpop.f32.mrb[0].mxu0
        %2010 = vdwg.mxu0
        %vm2011 = vcmask 15360
        %v2012 = vsel %vm2011, %v2006, -inf
        %2013 = vmax.xlane.f32.xlu0 %v2012
        %v2014 = vpop.xlane.xlu0 %2013
        %v2015 = vsub.f32 %v2006, %v2014
        %v2016 = vmul.f32 %v2015, 1.442695
        %v2017 = vpow.pop %v2016
        %v2018 = vsel %vm2011, %v2017, 0.0
        %2019 = vadd.xlane.f32.xlu0 %v2018
        %v2020 = vpop.xlane.xlu0 %2019
        %v2021 = vrcp.pop %v2020
        %v2022 = vmul.f32 %v2017, %v2021
        %2023 = vst [vmem:[%s166] sm:$0xff] %v1965
        %2024 = vst [vmem:[%s166 + $0x8] sm:$0xff] %v1967
        %2025 = vst [vmem:[%s166 + $0x10] sm:$0xff] %v2006
        %2026 = vst.msk [vmem:[%s166 + $0x10] sm:$0xff] %vm2011, %v2022
        %s2027 = sand.u32 %s93, 1
        %s2028 = scalar_lea.sflag [#allocation3], %s2027
        %s2029 = sand.u32 %s93, 1
        %s2030 = smul.addr %s2029, 24
        %s2031 = scalar_lea.vmem [#allocation2], %s2030
        // Predicated region
        $region33: #{tpu_custom_call.1} parent=31 // pred_check
          %p2032 = pneg %p103
        $region34: #{tpu_custom_call.1} parent=31 // pred_check_branch
          %2034 = sbr.rel (%p2032) target = $region36
        $region35: #{tpu_custom_call.1} parent=31 // pred_region
          %s2036 = ssub.s32 384, 384
          %2037 = vsyncadd %s2028, %s2036
          %s2038 = smul.addr %s17, 3
          %s2039 = smul.addr %s2038, 128
          %s2040 = scalar_lea.hbm %s3, %s2039
          %s2042 = sshll.u32 %s2031, 4
          %s2043 = int_to_ptr.vmem [resolvable:$true] %s2042
          %2045 = dma.vmem_to_hbm [thread:$0]  %s2043, 384, %s2040, %s2028
        $region36: #{tpu_custom_call.1} parent=31 // pred_fallthru
          _
      $region32: #{tpu_custom_call.1} parent=5 // pred_fallthru
        _
      %p2046 = scmp.le.s32.totalorder 2, %s12
      // Predicated region
      $region37: #{tpu_custom_call.1} parent=5 // pred_check
        %p2047 = pneg %p2046
      $region38: #{tpu_custom_call.1} parent=5 // pred_check_branch
        %2049 = sbr.rel (%p2047) target = $region40
      $region39: #{tpu_custom_call.1} parent=5 // pred_region
        %s2050 = ssub.s32 %s12, 2
        // Predicated region
        $region41: #{tpu_custom_call.1} parent=39 // pred_check
          %p2051 = pneg %p109
        $region42: #{tpu_custom_call.1} parent=39 // pred_check_branch
          %2053 = sbr.rel (%p2051) target = $region44
        $region43: #{tpu_custom_call.1} parent=39 // pred_region
          %s2054 = sand.u32 %s94, 1
          %s2055 = scalar_lea.sflag [#allocation3], %s2054
          %s2056 = sand.u32 %s94, 1
          %s2057 = smul.addr %s2056, 24
          %s2058 = scalar_lea.vmem [#allocation2], %s2057
          %2059 = dma.done %s2055, 384
        $region44: #{tpu_custom_call.1} parent=39 // pred_fallthru
          _
      $region40: #{tpu_custom_call.1} parent=5 // pred_fallthru
        _
    $region6: #{tpu_custom_call.1} parent=1 // loop_footer
      %s16 = sadd.s32 1, %s12
    $region7: #{tpu_custom_call.1} parent=1 // loop_footer_branch
      %11 = sbr.rel target = $region3
    $region8: #{tpu_custom_call.1} parent=1 // loop_exit
      _
    %2060 = vsyncpa [#allocation3], 1
    %s2061 = scalar_lea.sflag [#allocation3], 1
    %2062 = vsyncpa %s2061, 1

</llo_original>
